<compile_context>
chip_gen: v7x
topology: tpu7x:2x2x1
jax: 0.10.0
libtpu: 0.0.40
codegen_flags: <defaults>
</compile_context>

<pallas_src>
import functools

import jax
import jax.numpy as jnp
from jax import lax
from jax.experimental import pallas as pl
from jax.experimental.pallas import tpu as pltpu

ALPHA = 0.25
GAMMA = 2.0                         # gamma == 2.0 -> pow(x, gamma) == x * x
POS_THRESH = 0.5
NEG_THRESH = 0.4
SCALE_FACTOR = (0.1, 0.1, 0.1, 0.1, 0.1, 0.1)
INV_SCALE = tuple(1.0 / s for s in SCALE_FACTOR)   # fold /0.1 into *10
EPS_CLS = 1e-4


# --------------------------------------------------------------------------- #
# In-kernel helpers
# --------------------------------------------------------------------------- #
def _fold_lanes(x):
    """[..., tn] -> [..., 128] by pairwise halving (tn is 128 * 2**k).

    Pure vreg-aligned adds (no cross-lane XLU work, no narrow masked stores);
    the final cross-lane reduce happens once, at finalize time.
    """
    n = x.shape[-1]
    assert n % 128 == 0
    while n > 128:
        h = n // 2
        x = x[..., :h] + x[..., h:n]
        n = h
    return x


def _smooth_l1(diff):
    return jnp.where(diff <= 1.0 / 9.0, 4.5 * diff * diff, diff - 0.5 / 9.0)


def _tile_losses(p_raw, a, g, r, lane_ok):
    """Per-block focal / regression losses.

    p_raw   : raw classification block.
    a(c)    : anchor feature c   (broadcastable against p_raw).
    g(c)    : GT feature c       (scalar or [B,1], broadcastable).
    r(k)    : regression component k (same shape as p_raw).
    lane_ok : bool mask of in-bounds lanes (or None).  OOB lanes may contain
              arbitrary garbage; everything below is where-masked so garbage
              (even NaN/Inf) cannot leak into the sums.

    Returns (cls_loss, valid, pos, reg_loss) as f32 blocks shaped like p_raw.
    """
    p = jnp.clip(p_raw.astype(jnp.float32), EPS_CLS, 1.0 - EPS_CLS)

    # -------- IoU of every anchor in the block vs the (single) GT box --------
    inter = None
    for c in range(3):
        d = jnp.maximum(jnp.minimum(a(3 + c), g(3 + c)) - jnp.maximum(a(c), g(c)), 0.0)
        inter = d if inter is None else inter * d
    ua = jnp.maximum(a(6) + g(6) - inter, 1e-8)
    iou = inter / ua

    pos = iou >= POS_THRESH
    valid = jnp.logical_or(pos, iou < NEG_THRESH)
    if lane_ok is not None:
        pos = jnp.logical_and(pos, lane_ok)
        valid = jnp.logical_and(valid, lane_ok)

    # -------- classification focal loss (one log per element) --------
    om = 1.0 - p
    q = jnp.where(pos, om, p)                     # focal-weight argument
    af = jnp.where(pos, ALPHA, 1.0 - ALPHA)
    cls_loss = -(af * q * q) * jnp.log(jnp.where(pos, p, om))   # gamma == 2.0
    cls_loss = jnp.where(valid, cls_loss, 0.0)

    # -------- regression smooth-L1 on positive anchors --------
    reg_l = jnp.zeros_like(p)
    for k in range(3):            # center-offset targets: (g_ctr - a_ctr) / a_dim
        tgt = (g(7 + k) - a(7 + k)) * a(10 + k)
        reg_l = reg_l + _smooth_l1(
            jnp.abs(tgt * INV_SCALE[k] - r(k).astype(jnp.float32)))
    for k in range(3):            # log-scale targets: log(g_dim_clamped) - log(a_dim)
        tgt = g(10 + k) - a(13 + k)
        reg_l = reg_l + _smooth_l1(
            jnp.abs(tgt * INV_SCALE[3 + k] - r(3 + k).astype(jnp.float32)))
    reg_l = jnp.where(pos, reg_l, 0.0)            # where-mask (NaN-safe)

    return cls_loss, valid.astype(jnp.float32), pos.astype(jnp.float32), reg_l


def _focal_loss_kernel(anc_ref, gt_ref, cls_ref, reg_ref,
                       closs_ref, rloss_ref,
                       acc_c, acc_v, acc_p, acc_r,
                       *, folded, n_per_row, tn, batch):
    # Folded (B < 8):
    #   anc_ref [16, 8, TN]  gt_ref [B, 13] (SMEM)  cls_ref [B, 8, TN]
    #   reg_ref [6, B, 8, TN]      accumulators (B, 8, 128)
    # Flat (fallback):
    #   anc_ref [16, TN]     gt_ref [B, 13] (VMEM)  cls_ref [B, TN]
    #   reg_ref [6, B, TN]         accumulators (B, 128)
    i = pl.program_id(0)

    @pl.when(i == 0)
    def _init():
        acc_c[...] = jnp.zeros(acc_c.shape, acc_c.dtype)
        acc_v[...] = jnp.zeros(acc_v.shape, acc_v.dtype)
        acc_p[...] = jnp.zeros(acc_p.shape, acc_p.dtype)
        acc_r[...] = jnp.zeros(acc_r.shape, acc_r.dtype)

    # Lane-validity mask (only the last tile can be ragged; Pallas pads the
    # OOB region of the block with unspecified data).
    lane_ok = None
    if (n_per_row % tn) != 0:
        lane = i * tn + lax.broadcasted_iota(jnp.int32, (1, tn), 1)
        lane_ok = lane < n_per_row

    if folded:
        for b in range(batch):
            cls_l, val, pos, reg_l = _tile_losses(
                cls_ref[b],
                lambda c: anc_ref[c],                     # [8, TN]
                lambda c, b=b: gt_ref[b, c],              # SMEM scalar
                lambda k, b=b: reg_ref[k, b],             # [8, TN]
                lane_ok)
            acc_c[b] = acc_c[b] + _fold_lanes(cls_l)
            acc_v[b] = acc_v[b] + _fold_lanes(val)
            acc_p[b] = acc_p[b] + _fold_lanes(pos)
            acc_r[b] = acc_r[b] + _fold_lanes(reg_l)
    else:
        cls_l, val, pos, reg_l = _tile_losses(
            cls_ref[...],
            lambda c: anc_ref[c:c + 1, :],                # [1, TN]
            lambda c: gt_ref[:, c:c + 1],                 # [B, 1]
            lambda k: reg_ref[k],                         # [B, TN]
            lane_ok)
        acc_c[...] += _fold_lanes(cls_l)
        acc_v[...] += _fold_lanes(val)
        acc_p[...] += _fold_lanes(pos)
        acc_r[...] += _fold_lanes(reg_l)

    # ---------------- finalize on the last N tile ----------------
    @pl.when(i == pl.num_programs(0) - 1)
    def _final():
        if folded:
            c_tot = 0.0
            r_tot = 0.0
            for b in range(batch):
                cs = jnp.sum(acc_c[b])
                vc = jnp.sum(acc_v[b])
                ps = jnp.sum(acc_p[b])
                rs = jnp.sum(acc_r[b])
                c_tot = c_tot + cs / jnp.maximum(vc, 1.0)
                r_tot = r_tot + jnp.where(
                    ps > 0.0, rs / jnp.maximum(ps * 6.0, 1.0), 0.0)
        else:
            cs = jnp.sum(acc_c[...], axis=1, keepdims=True)
            vc = jnp.sum(acc_v[...], axis=1, keepdims=True)
            ps = jnp.sum(acc_p[...], axis=1, keepdims=True)
            rs = jnp.sum(acc_r[...], axis=1, keepdims=True)
            c_tot = jnp.sum(cs / jnp.maximum(vc, 1.0))
            r_tot = jnp.sum(jnp.where(ps > 0.0,
                                      rs / jnp.maximum(ps * 6.0, 1.0), 0.0))
        closs_ref[0, 0] = c_tot * (1.0 / batch)
        rloss_ref[0, 0] = r_tot * (1.0 / batch)


# --------------------------------------------------------------------------- #
# Host wrapper
# --------------------------------------------------------------------------- #
def focal_loss_pallas(classifications, regressions, anchors, labels, *,
                      tile_anchors=32768, reg_transpose_dtype=None):
    """Focal_Loss forward.

    classifications [B, N] (probabilities), regressions [B, N, 6],
    anchors [1, N, 6], labels [B, 1, 6] (one GT box per sample).
    Returns {'c_loss': scalar, 'r_loss': scalar}.
    """
    B, N = classifications.shape
    f32 = jnp.float32
    assert regressions.shape == (B, N, 6)
    assert anchors.shape[-2:] == (N, 6)
    assert labels.shape == (B, 1, 6)
    assert tile_anchors >= 128 and (tile_anchors & (tile_anchors - 1)) == 0

    # Fold 8 anchor segments onto the sublane axis when the batch alone cannot
    # fill the 8 sublanes of a vreg (B < 8); falls back to 2-D [B, N] blocks
    # otherwise (or when N is not a multiple of 8).
    folded = (B < 8) and (N % 8 == 0)
    F = 8 if folded else 1
    n_row = N // F                               # lane extent per row
    assert tile_anchors % (128 * F) == 0

    # Lane tile: power-of-two multiple of 128 (keeps the in-kernel pairwise
    # lane fold vreg-aligned), capped by the actual lane extent and shrunk to
    # stay well inside the v7x 64 MiB (32 MiB scoped) VMEM budget.
    tn = int(min(tile_anchors // F,
                 pl.next_power_of_2(pl.cdiv(n_row, 128)) * 128))
    cls_b = jnp.dtype(classifications.dtype).itemsize
    reg_b = (jnp.dtype(reg_transpose_dtype).itemsize
             if reg_transpose_dtype is not None
             else jnp.dtype(regressions.dtype).itemsize)

    def _blk_bytes(t):
        return F * t * (16 * 4 + B * cls_b + 6 * B * reg_b)

    while tn > 128 and 4 * _blk_bytes(tn) + (8 << 20) > (48 << 20):
        tn //= 2
    grid = (pl.cdiv(n_row, tn),)
    vmem_bytes = int(min(48 << 20, max(16 << 20, 4 * _blk_bytes(tn) + (8 << 20))))

    # ---- batch-invariant anchor features, computed once: [16, N] ----
    a = anchors.reshape(-1, N, 6)[0].astype(f32)
    z0, y0, x0, z1, y1, x1 = (a[:, k] for k in range(6))
    ad, ah, aw = z1 - z0, y1 - y0, x1 - x0
    anc_pack = jnp.stack([
        z0, y0, x0, z1, y1, x1,
        ad * ah * aw,                                       # anchor volume
        z0 + 0.5 * ad, y0 + 0.5 * ah, x0 + 0.5 * aw,        # anchor centers
        1.0 / ad, 1.0 / ah, 1.0 / aw,                       # reciprocal dims
        jnp.log(ad), jnp.log(ah), jnp.log(aw),              # log dims
    ], axis=0)

    # ---- tiny per-sample GT scalars: [B, 13] ----
    g = labels[:, 0, :].astype(f32)
    gd, gh, gw = g[:, 3] - g[:, 0], g[:, 4] - g[:, 1], g[:, 5] - g[:, 2]
    gt_pack = jnp.stack([
        g[:, 0], g[:, 1], g[:, 2], g[:, 3], g[:, 4], g[:, 5],
        gd * gh * gw,
        g[:, 0] + 0.5 * gd, g[:, 1] + 0.5 * gh, g[:, 2] + 0.5 * gw,
        jnp.log(jnp.maximum(gd, 1.0)),
        jnp.log(jnp.maximum(gh, 1.0)),
        jnp.log(jnp.maximum(gw, 1.0)),
    ], axis=1)

    # ---- regressions as [6, B, N] (single relayout copy, optionally bf16) ----
    # TODO(synk): have the producer emit regressions as [6, B, N] (ideally bf16)
    # so this relayout pass disappears from the end-to-end HBM traffic.
    reg_t = jnp.transpose(regressions, (2, 0, 1))
    if reg_transpose_dtype is not None:
        reg_t = reg_t.astype(reg_transpose_dtype)

    if folded:
        anc_in = anc_pack.reshape(16, 8, n_row)
        cls_in = classifications.reshape(B, 8, n_row)
        reg_in = reg_t.reshape(6, B, 8, n_row)
        in_specs = [
            pl.BlockSpec((16, 8, tn), lambda i: (0, 0, i)),
            pl.BlockSpec(memory_space=pltpu.MemorySpace.SMEM),       # GT scalars
            pl.BlockSpec((B, 8, tn), lambda i: (0, 0, i)),
            pl.BlockSpec((6, B, 8, tn), lambda i: (0, 0, 0, i)),
        ]
        scratch = [pltpu.VMEM((B, 8, 128), f32) for _ in range(4)]
    else:
        anc_in, cls_in, reg_in = anc_pack, classifications, reg_t
        in_specs = [
            pl.BlockSpec((16, tn), lambda i: (0, i)),
            pl.BlockSpec((B, 13), lambda i: (0, 0)),                 # GT columns
            pl.BlockSpec((B, tn), lambda i: (0, i)),
            pl.BlockSpec((6, B, tn), lambda i: (0, 0, i)),
        ]
        scratch = [pltpu.VMEM((B, 128), f32) for _ in range(4)]

    kernel = functools.partial(_focal_loss_kernel, folded=folded,
                               n_per_row=n_row, tn=tn, batch=B)

    # TODO(synk): on v7x (2 TensorCores) add a leading "parallel" grid axis over
    # N-chunks with per-chunk partial-sum outputs and a tiny JAX-side combine so
    # both cores participate in the reduction.
    closs, rloss = pl.pallas_call(
        kernel,
        grid=grid,
        in_specs=in_specs,
        out_specs=(
            pl.BlockSpec((1, 1), lambda i: (0, 0),
                         memory_space=pltpu.MemorySpace.SMEM),
            pl.BlockSpec((1, 1), lambda i: (0, 0),
                         memory_space=pltpu.MemorySpace.SMEM),
        ),
        out_shape=(
            jax.ShapeDtypeStruct((1, 1), f32),
            jax.ShapeDtypeStruct((1, 1), f32),
        ),
        scratch_shapes=scratch,
        compiler_params=pltpu.CompilerParams(
            dimension_semantics=("arbitrary",),            # N is a reduction axis
            vmem_limit_bytes=vmem_bytes),
    )(anc_in, gt_pack, cls_in, reg_in)

    return {"c_loss": closs[0, 0], "r_loss": rloss[0, 0]}


# --------------------------------------------------------------------------- #
# Pure-JAX mirror of the PyTorch forward (verification only)
# --------------------------------------------------------------------------- #
def focal_loss_ref(classifications, regressions, anchors, labels):
    a = anchors.reshape(-1, anchors.shape[-2], 6)[0].astype(jnp.float32)
    B = classifications.shape[0]
    c_losses, r_losses = [], []
    for j in range(B):
        cls = jnp.clip(classifications[j].astype(jnp.float32), EPS_CLS, 1.0 - EPS_CLS)
        b = labels[j].astype(jnp.float32)                 # [1, 6]
        area = (b[:, 3] - b[:, 0]) * (b[:, 4] - b[:, 1]) * (b[:, 5] - b[:, 2])
        inter_d = jnp.maximum(jnp.minimum(a[:, 3], b[:, 3]) - jnp.maximum(a[:, 0], b[:, 0]), 0.0)
        inter_w = jnp.maximum(jnp.minimum(a[:, 4], b[:, 4]) - jnp.maximum(a[:, 1], b[:, 1]), 0.0)
        inter_h = jnp.maximum(jnp.minimum(a[:, 5], b[:, 5]) - jnp.maximum(a[:, 2], b[:, 2]), 0.0)
        inter = inter_d * inter_w * inter_h
        ua = jnp.maximum((a[:, 3] - a[:, 0]) * (a[:, 4] - a[:, 1]) * (a[:, 5] - a[:, 2])
                         + area - inter, 1e-8)
        iou = inter / ua
        t = jnp.where(iou < NEG_THRESH, 0.0, -1.0)
        t = jnp.where(iou >= POS_THRESH, 1.0, t)
        af = jnp.where(t == 1.0, ALPHA, 1.0 - ALPHA)
        fw = jnp.where(t == 1.0, 1.0 - cls, cls)
        fw = af * fw * fw
        bce = -(t * jnp.log(cls) + (1.0 - t) * jnp.log(1.0 - cls))
        cl = jnp.where(t != -1.0, fw * bce, 0.0)
        c_losses.append(jnp.sum(cl) /
                        jnp.maximum(jnp.sum((t != -1.0).astype(jnp.float32)), 1.0))

        pos = iou >= POS_THRESH
        npos = jnp.sum(pos.astype(jnp.float32))
        ad, ah, aw = a[:, 3] - a[:, 0], a[:, 4] - a[:, 1], a[:, 5] - a[:, 2]
        acz, acy, acx = a[:, 0] + 0.5 * ad, a[:, 1] + 0.5 * ah, a[:, 2] + 0.5 * aw
        gd, gh, gw = b[:, 3] - b[:, 0], b[:, 4] - b[:, 1], b[:, 5] - b[:, 2]
        gcz, gcy, gcx = b[:, 0] + 0.5 * gd, b[:, 1] + 0.5 * gh, b[:, 2] + 0.5 * gw
        gd, gh, gw = jnp.maximum(gd, 1.0), jnp.maximum(gh, 1.0), jnp.maximum(gw, 1.0)
        tg = jnp.stack([(gcz - acz) / ad, (gcy - acy) / ah, (gcx - acx) / aw,
                        jnp.log(gd / ad), jnp.log(gh / ah), jnp.log(gw / aw)], axis=1)
        tg = tg / jnp.asarray(SCALE_FACTOR, jnp.float32)
        diff = jnp.abs(tg - regressions[j].astype(jnp.float32))
        rl = jnp.where(diff <= 1.0 / 9.0, 0.5 * 9.0 * diff * diff, diff - 0.5 / 9.0)
        rl = jnp.where(pos[:, None], rl, 0.0)
        r_losses.append(jnp.where(npos > 0,
                                  jnp.sum(rl) / jnp.maximum(npos * 6.0, 1.0), 0.0))
    return {"c_loss": jnp.mean(jnp.stack(c_losses)),
            "r_loss": jnp.mean(jnp.stack(r_losses))}


if __name__ == "__main__":
    key = jax.random.PRNGKey(0)
    k1, k2, k3, k4, k5 = jax.random.split(key, 5)

    # ---------------- test 1: folded path (B=2), multi-tile + ragged tail ----
    B, N = 2, 6000
    ctr = jax.random.uniform(k1, (N, 3), minval=16.0, maxval=48.0)
    size = jax.random.uniform(k2, (N, 3), minval=4.0, maxval=12.0)
    anchor = jnp.concatenate([ctr - 0.5 * size, ctr + 0.5 * size], axis=1)
    anchors = anchor[None]                                  # [1, N, 6]

    classifications = jax.nn.sigmoid(jax.random.normal(k3, (B, N)))   # [B, N]
    regressions = 0.1 * jax.random.normal(k4, (B, N, 6))              # [B, N, 6]

    gt0 = anchor[7]                                         # exact match -> positives
    gctr = jax.random.uniform(k5, (3,), minval=16.0, maxval=48.0)
    gt1 = jnp.concatenate([gctr - 4.0, gctr + 4.0])
    labels = jnp.stack([gt0, gt1])[:, None, :]              # [B, 1, 6]

    # small tile on purpose so the grid has 3 steps (incl. a ragged last tile)
    out = focal_loss_pallas(classifications, regressions, anchors, labels,
                            tile_anchors=2048)
    out = jax.tree_util.tree_map(jax.block_until_ready, out)
    ref = focal_loss_ref(classifications, regressions, anchors, labels)
    assert jnp.allclose(out["c_loss"], ref["c_loss"], rtol=1e-4, atol=1e-5), (out, ref)
    assert jnp.allclose(out["r_loss"], ref["r_loss"], rtol=1e-4, atol=1e-5), (out, ref)

    # ---------------- test 2: flat fallback (N % 8 != 0) with bf16 regressions ----
    N2 = 772
    cls2 = classifications[:, :N2]
    reg2 = regressions[:, :N2]
    anchors2 = anchors[:, :N2]
    out2 = focal_loss_pallas(cls2, reg2, anchors2, labels,
                             tile_anchors=256, reg_transpose_dtype=jnp.bfloat16)
    out2 = jax.tree_util.tree_map(jax.block_until_ready, out2)
    ref2 = focal_loss_ref(cls2, reg2.astype(jnp.bfloat16).astype(jnp.float32),
                          anchors2, labels)
    assert jnp.allclose(out2["c_loss"], ref2["c_loss"], rtol=1e-4, atol=1e-5), (out2, ref2)
    assert jnp.allclose(out2["r_loss"], ref2["r_loss"], rtol=1e-3, atol=1e-5), (out2, ref2)

    print("KERNEL_OK")
</pallas_src>

<mosaic_0001>
module attributes {stable_mosaic.version = 11 : i64} {
  func.func @_focal_loss_kernel(%arg0: i32, %arg1: memref<16x8x256xf32, #tpu.memory_space<vmem>>, %arg2: memref<2x13xf32, #tpu.memory_space<smem>>, %arg3: memref<2x8x256xf32, #tpu.memory_space<vmem>>, %arg4: memref<6x2x8x256xf32, #tpu.memory_space<vmem>>, %arg5: memref<1x1xf32, #tpu.memory_space<smem>>, %arg6: memref<1x1xf32, #tpu.memory_space<smem>>, %arg7: memref<2x8x128xf32, #tpu.memory_space<vmem>>, %arg8: memref<2x8x128xf32, #tpu.memory_space<vmem>>, %arg9: memref<2x8x128xf32, #tpu.memory_space<vmem>>, %arg10: memref<2x8x128xf32, #tpu.memory_space<vmem>>) attributes {dimension_semantics = [#tpu.dimension_semantics<arbitrary>], iteration_bounds = array<i64: 3>, scalar_prefetch = 0 : i64, scratch_operands = 4 : i64, tpu.core_type = #tpu.core_type<tc>, window_params = [{transform_indices = @transform_0, window_bounds = array<i64: 16, 8, 256>}, {transform_indices = @transform_1, window_bounds = array<i64: 2, 13>}, {transform_indices = @transform_2, window_bounds = array<i64: 2, 8, 256>}, {transform_indices = @transform_3, window_bounds = array<i64: 6, 2, 8, 256>}, {transform_indices = @transform_4, window_bounds = array<i64: 1, 1>}, {transform_indices = @transform_5, window_bounds = array<i64: 1, 1>}]} {
    %c0_i32 = arith.constant 0 : i32
    %0 = arith.cmpi eq, %arg0, %c0_i32 : i32
    %1 = arith.extui %0 : i1 to i32
    %c0_i32_0 = arith.constant 0 : i32
    %2 = arith.cmpi ne, %1, %c0_i32_0 : i32
    scf.if %2 {
      %cst_313 = arith.constant 0.000000e+00 : f32
      %516 = vector.broadcast %cst_313 : f32 to vector<2x8x128xf32>
      %c0_314 = arith.constant 0 : index
      %c0_315 = arith.constant 0 : index
      %c0_316 = arith.constant 0 : index
      %517 = vector.load %arg7[%c0_314, %c0_315, %c0_316] : memref<2x8x128xf32, #tpu.memory_space<vmem>>, vector<2x8x128xf32>
      tpu.vector_store %arg7[%c0_314, %c0_315, %c0_316], %516 {strides = array<i32>} : memref<2x8x128xf32, #tpu.memory_space<vmem>>, vector<2x8x128xf32>,
      %cst_317 = arith.constant 0.000000e+00 : f32
      %518 = vector.broadcast %cst_317 : f32 to vector<2x8x128xf32>
      %c0_318 = arith.constant 0 : index
      %c0_319 = arith.constant 0 : index
      %c0_320 = arith.constant 0 : index
      %519 = vector.load %arg8[%c0_318, %c0_319, %c0_320] : memref<2x8x128xf32, #tpu.memory_space<vmem>>, vector<2x8x128xf32>
      tpu.vector_store %arg8[%c0_318, %c0_319, %c0_320], %518 {strides = array<i32>} : memref<2x8x128xf32, #tpu.memory_space<vmem>>, vector<2x8x128xf32>,
      %cst_321 = arith.constant 0.000000e+00 : f32
      %520 = vector.broadcast %cst_321 : f32 to vector<2x8x128xf32>
      %c0_322 = arith.constant 0 : index
      %c0_323 = arith.constant 0 : index
      %c0_324 = arith.constant 0 : index
      %521 = vector.load %arg9[%c0_322, %c0_323, %c0_324] : memref<2x8x128xf32, #tpu.memory_space<vmem>>, vector<2x8x128xf32>
      tpu.vector_store %arg9[%c0_322, %c0_323, %c0_324], %520 {strides = array<i32>} : memref<2x8x128xf32, #tpu.memory_space<vmem>>, vector<2x8x128xf32>,
      %cst_325 = arith.constant 0.000000e+00 : f32
      %522 = vector.broadcast %cst_325 : f32 to vector<2x8x128xf32>
      %c0_326 = arith.constant 0 : index
      %c0_327 = arith.constant 0 : index
      %c0_328 = arith.constant 0 : index
      %523 = vector.load %arg10[%c0_326, %c0_327, %c0_328] : memref<2x8x128xf32, #tpu.memory_space<vmem>>, vector<2x8x128xf32>
      tpu.vector_store %arg10[%c0_326, %c0_327, %c0_328], %522 {strides = array<i32>} : memref<2x8x128xf32, #tpu.memory_space<vmem>>, vector<2x8x128xf32>,
    } else {
    }
    %c256_i32 = arith.constant 256 : i32
    %3 = arith.muli %arg0, %c256_i32 : i32
    %4 = tpu.iota {dimensions = array<i32: 1>} : vector<1x256xi32>
    %5 = vector.broadcast %3 : i32 to vector<1x256xi32>
    %6 = arith.addi %5, %4 : vector<1x256xi32>
    %c750_i32 = arith.constant 750 : i32
    %7 = vector.broadcast %c750_i32 : i32 to vector<1x256xi32>
    %8 = arith.cmpi slt, %6, %7 : vector<1x256xi32>
    %c0 = arith.constant 0 : index
    %c0_1 = arith.constant 0 : index
    %c0_2 = arith.constant 0 : index
    %9 = vector.load %arg3[%c0, %c0_1, %c0_2] : memref<2x8x256xf32, #tpu.memory_space<vmem>>, vector<1x8x256xf32>
    %10 = vector.shape_cast %9 : vector<1x8x256xf32> to vector<8x256xf32>
    %cst = arith.constant 9.99999974E-5 : f32
    %cst_3 = arith.constant 0.999899983 : f32
    %11 = vector.broadcast %cst : f32 to vector<8x256xf32>
    %12 = arith.maximumf %11, %10 : vector<8x256xf32>
    %13 = vector.broadcast %cst_3 : f32 to vector<8x256xf32>
    %14 = arith.minimumf %13, %12 : vector<8x256xf32>
    %c3 = arith.constant 3 : index
    %c0_4 = arith.constant 0 : index
    %c0_5 = arith.constant 0 : index
    %15 = vector.load %arg1[%c3, %c0_4, %c0_5] : memref<16x8x256xf32, #tpu.memory_space<vmem>>, vector<1x8x256xf32>
    %16 = vector.shape_cast %15 : vector<1x8x256xf32> to vector<8x256xf32>
    %c0_6 = arith.constant 0 : index
    %c3_7 = arith.constant 3 : index
    %17 = memref.load %arg2[%c0_6, %c3_7] : memref<2x13xf32, #tpu.memory_space<smem>>
    %18 = vector.broadcast %17 : f32 to vector<8x256xf32>
    %19 = arith.minimumf %16, %18 : vector<8x256xf32>
    %c0_8 = arith.constant 0 : index
    %c0_9 = arith.constant 0 : index
    %c0_10 = arith.constant 0 : index
    %20 = vector.load %arg1[%c0_8, %c0_9, %c0_10] : memref<16x8x256xf32, #tpu.memory_space<vmem>>, vector<1x8x256xf32>
    %21 = vector.shape_cast %20 : vector<1x8x256xf32> to vector<8x256xf32>
    %c0_11 = arith.constant 0 : index
    %c0_12 = arith.constant 0 : index
    %22 = memref.load %arg2[%c0_11, %c0_12] : memref<2x13xf32, #tpu.memory_space<smem>>
    %23 = vector.broadcast %22 : f32 to vector<8x256xf32>
    %24 = arith.maximumf %21, %23 : vector<8x256xf32>
    %25 = arith.subf %19, %24 : vector<8x256xf32>
    %cst_13 = arith.constant 0.000000e+00 : f32
    %26 = vector.broadcast %cst_13 : f32 to vector<8x256xf32>
    %27 = arith.maximumf %25, %26 : vector<8x256xf32>
    %c4 = arith.constant 4 : index
    %c0_14 = arith.constant 0 : index
    %c0_15 = arith.constant 0 : index
    %28 = vector.load %arg1[%c4, %c0_14, %c0_15] : memref<16x8x256xf32, #tpu.memory_space<vmem>>, vector<1x8x256xf32>
    %29 = vector.shape_cast %28 : vector<1x8x256xf32> to vector<8x256xf32>
    %c0_16 = arith.constant 0 : index
    %c4_17 = arith.constant 4 : index
    %30 = memref.load %arg2[%c0_16, %c4_17] : memref<2x13xf32, #tpu.memory_space<smem>>
    %31 = vector.broadcast %30 : f32 to vector<8x256xf32>
    %32 = arith.minimumf %29, %31 : vector<8x256xf32>
    %c1 = arith.constant 1 : index
    %c0_18 = arith.constant 0 : index
    %c0_19 = arith.constant 0 : index
    %33 = vector.load %arg1[%c1, %c0_18, %c0_19] : memref<16x8x256xf32, #tpu.memory_space<vmem>>, vector<1x8x256xf32>
    %34 = vector.shape_cast %33 : vector<1x8x256xf32> to vector<8x256xf32>
    %c0_20 = arith.constant 0 : index
    %c1_21 = arith.constant 1 : index
    %35 = memref.load %arg2[%c0_20, %c1_21] : memref<2x13xf32, #tpu.memory_space<smem>>
    %36 = vector.broadcast %35 : f32 to vector<8x256xf32>
    %37 = arith.maximumf %34, %36 : vector<8x256xf32>
    %38 = arith.subf %32, %37 : vector<8x256xf32>
    %cst_22 = arith.constant 0.000000e+00 : f32
    %39 = vector.broadcast %cst_22 : f32 to vector<8x256xf32>
    %40 = arith.maximumf %38, %39 : vector<8x256xf32>
    %41 = arith.mulf %27, %40 : vector<8x256xf32>
    %c5 = arith.constant 5 : index
    %c0_23 = arith.constant 0 : index
    %c0_24 = arith.constant 0 : index
    %42 = vector.load %arg1[%c5, %c0_23, %c0_24] : memref<16x8x256xf32, #tpu.memory_space<vmem>>, vector<1x8x256xf32>
    %43 = vector.shape_cast %42 : vector<1x8x256xf32> to vector<8x256xf32>
    %c0_25 = arith.constant 0 : index
    %c5_26 = arith.constant 5 : index
    %44 = memref.load %arg2[%c0_25, %c5_26] : memref<2x13xf32, #tpu.memory_space<smem>>
    %45 = vector.broadcast %44 : f32 to vector<8x256xf32>
    %46 = arith.minimumf %43, %45 : vector<8x256xf32>
    %c2 = arith.constant 2 : index
    %c0_27 = arith.constant 0 : index
    %c0_28 = arith.constant 0 : index
    %47 = vector.load %arg1[%c2, %c0_27, %c0_28] : memref<16x8x256xf32, #tpu.memory_space<vmem>>, vector<1x8x256xf32>
    %48 = vector.shape_cast %47 : vector<1x8x256xf32> to vector<8x256xf32>
    %c0_29 = arith.constant 0 : index
    %c2_30 = arith.constant 2 : index
    %49 = memref.load %arg2[%c0_29, %c2_30] : memref<2x13xf32, #tpu.memory_space<smem>>
    %50 = vector.broadcast %49 : f32 to vector<8x256xf32>
    %51 = arith.maximumf %48, %50 : vector<8x256xf32>
    %52 = arith.subf %46, %51 : vector<8x256xf32>
    %cst_31 = arith.constant 0.000000e+00 : f32
    %53 = vector.broadcast %cst_31 : f32 to vector<8x256xf32>
    %54 = arith.maximumf %52, %53 : vector<8x256xf32>
    %55 = arith.mulf %41, %54 : vector<8x256xf32>
    %c6 = arith.constant 6 : index
    %c0_32 = arith.constant 0 : index
    %c0_33 = arith.constant 0 : index
    %56 = vector.load %arg1[%c6, %c0_32, %c0_33] : memref<16x8x256xf32, #tpu.memory_space<vmem>>, vector<1x8x256xf32>
    %57 = vector.shape_cast %56 : vector<1x8x256xf32> to vector<8x256xf32>
    %c0_34 = arith.constant 0 : index
    %c6_35 = arith.constant 6 : index
    %58 = memref.load %arg2[%c0_34, %c6_35] : memref<2x13xf32, #tpu.memory_space<smem>>
    %59 = vector.broadcast %58 : f32 to vector<8x256xf32>
    %60 = arith.addf %57, %59 : vector<8x256xf32>
    %61 = arith.subf %60, %55 : vector<8x256xf32>
    %cst_36 = arith.constant 9.99999993E-9 : f32
    %62 = vector.broadcast %cst_36 : f32 to vector<8x256xf32>
    %63 = arith.maximumf %61, %62 : vector<8x256xf32>
    %64 = arith.divf %55, %63 : vector<8x256xf32>
    %cst_37 = arith.constant 5.000000e-01 : f32
    %65 = vector.broadcast %cst_37 : f32 to vector<8x256xf32>
    %66 = arith.cmpf oge, %64, %65 : vector<8x256xf32>
    %cst_38 = arith.constant 4.000000e-01 : f32
    %67 = vector.broadcast %cst_38 : f32 to vector<8x256xf32>
    %68 = arith.cmpf olt, %64, %67 : vector<8x256xf32>
    %69 = arith.ori %66, %68 : vector<8x256xi1>
    %70 = vector.broadcast %8 : vector<1x256xi1> to vector<8x256xi1>
    %71 = arith.andi %66, %70 : vector<8x256xi1>
    %72 = vector.broadcast %8 : vector<1x256xi1> to vector<8x256xi1>
    %73 = arith.andi %69, %72 : vector<8x256xi1>
    %cst_39 = arith.constant 1.000000e+00 : f32
    %74 = vector.broadcast %cst_39 : f32 to vector<8x256xf32>
    %75 = arith.subf %74, %14 : vector<8x256xf32>
    %76 = arith.select %71, %75, %14 : vector<8x256xi1>, vector<8x256xf32>
    %cst_40 = arith.constant 2.500000e-01 : f32
    %cst_41 = arith.constant 7.500000e-01 : f32
    %77 = vector.broadcast %cst_40 : f32 to vector<8x256xf32>
    %78 = vector.broadcast %cst_41 : f32 to vector<8x256xf32>
    %79 = arith.select %71, %77, %78 : vector<8x256xi1>, vector<8x256xf32>
    %80 = arith.mulf %79, %76 : vector<8x256xf32>
    %81 = arith.mulf %80, %76 : vector<8x256xf32>
    %cst_42 = arith.constant 0.000000e+00 : f32
    %82 = vector.broadcast %cst_42 : f32 to vector<8x256xf32>
    %83 = arith.subf %82, %81 : vector<8x256xf32>
    %84 = arith.select %71, %14, %75 : vector<8x256xi1>, vector<8x256xf32>
    %85 = math.log %84 : vector<8x256xf32>
    %86 = arith.mulf %83, %85 : vector<8x256xf32>
    %cst_43 = arith.constant 0.000000e+00 : f32
    %87 = vector.broadcast %cst_43 : f32 to vector<8x256xf32>
    %88 = arith.select %73, %86, %87 : vector<8x256xi1>, vector<8x256xf32>
    %cst_44 = arith.constant 0.000000e+00 : f32
    %89 = vector.broadcast %cst_44 : f32 to vector<8x256xf32>
    %c0_45 = arith.constant 0 : index
    %c7 = arith.constant 7 : index
    %90 = memref.load %arg2[%c0_45, %c7] : memref<2x13xf32, #tpu.memory_space<smem>>
    %c7_46 = arith.constant 7 : index
    %c0_47 = arith.constant 0 : index
    %c0_48 = arith.constant 0 : index
    %91 = vector.load %arg1[%c7_46, %c0_47, %c0_48] : memref<16x8x256xf32, #tpu.memory_space<vmem>>, vector<1x8x256xf32>
    %92 = vector.shape_cast %91 : vector<1x8x256xf32> to vector<8x256xf32>
    %93 = vector.broadcast %90 : f32 to vector<8x256xf32>
    %94 = arith.subf %93, %92 : vector<8x256xf32>
    %c10 = arith.constant 10 : index
    %c0_49 = arith.constant 0 : index
    %c0_50 = arith.constant 0 : index
    %95 = vector.load %arg1[%c10, %c0_49, %c0_50] : memref<16x8x256xf32, #tpu.memory_space<vmem>>, vector<1x8x256xf32>
    %96 = vector.shape_cast %95 : vector<1x8x256xf32> to vector<8x256xf32>
    %97 = arith.mulf %94, %96 : vector<8x256xf32>
    %cst_51 = arith.constant 1.000000e+01 : f32
    %98 = vector.broadcast %cst_51 : f32 to vector<8x256xf32>
    %99 = arith.mulf %97, %98 : vector<8x256xf32>
    %c0_52 = arith.constant 0 : index
    %c0_53 = arith.constant 0 : index
    %c0_54 = arith.constant 0 : index
    %c0_55 = arith.constant 0 : index
    %100 = vector.load %arg4[%c0_52, %c0_53, %c0_54, %c0_55] : memref<6x2x8x256xf32, #tpu.memory_space<vmem>>, vector<1x1x8x256xf32>
    %101 = vector.shape_cast %100 : vector<1x1x8x256xf32> to vector<8x256xf32>
    %102 = arith.subf %99, %101 : vector<8x256xf32>
    %103 = math.absf %102 : vector<8x256xf32>
    %cst_56 = arith.constant 0.111111112 : f32
    %104 = vector.broadcast %cst_56 : f32 to vector<8x256xf32>
    %105 = arith.cmpf ole, %103, %104 : vector<8x256xf32>
    %cst_57 = arith.constant 4.500000e+00 : f32
    %106 = vector.broadcast %cst_57 : f32 to vector<8x256xf32>
    %107 = arith.mulf %106, %103 : vector<8x256xf32>
    %108 = arith.mulf %107, %103 : vector<8x256xf32>
    %cst_58 = arith.constant 0.055555556 : f32
    %109 = vector.broadcast %cst_58 : f32 to vector<8x256xf32>
    %110 = arith.subf %103, %109 : vector<8x256xf32>
    %111 = arith.select %105, %108, %110 : vector<8x256xi1>, vector<8x256xf32>
    %112 = arith.addf %89, %111 : vector<8x256xf32>
    %c0_59 = arith.constant 0 : index
    %c8 = arith.constant 8 : index
    %113 = memref.load %arg2[%c0_59, %c8] : memref<2x13xf32, #tpu.memory_space<smem>>
    %c8_60 = arith.constant 8 : index
    %c0_61 = arith.constant 0 : index
    %c0_62 = arith.constant 0 : index
    %114 = vector.load %arg1[%c8_60, %c0_61, %c0_62] : memref<16x8x256xf32, #tpu.memory_space<vmem>>, vector<1x8x256xf32>
    %115 = vector.shape_cast %114 : vector<1x8x256xf32> to vector<8x256xf32>
    %116 = vector.broadcast %113 : f32 to vector<8x256xf32>
    %117 = arith.subf %116, %115 : vector<8x256xf32>
    %c11 = arith.constant 11 : index
    %c0_63 = arith.constant 0 : index
    %c0_64 = arith.constant 0 : index
    %118 = vector.load %arg1[%c11, %c0_63, %c0_64] : memref<16x8x256xf32, #tpu.memory_space<vmem>>, vector<1x8x256xf32>
    %119 = vector.shape_cast %118 : vector<1x8x256xf32> to vector<8x256xf32>
    %120 = arith.mulf %117, %119 : vector<8x256xf32>
    %cst_65 = arith.constant 1.000000e+01 : f32
    %121 = vector.broadcast %cst_65 : f32 to vector<8x256xf32>
    %122 = arith.mulf %120, %121 : vector<8x256xf32>
    %c1_66 = arith.constant 1 : index
    %c0_67 = arith.constant 0 : index
    %c0_68 = arith.constant 0 : index
    %c0_69 = arith.constant 0 : index
    %123 = vector.load %arg4[%c1_66, %c0_67, %c0_68, %c0_69] : memref<6x2x8x256xf32, #tpu.memory_space<vmem>>, vector<1x1x8x256xf32>
    %124 = vector.shape_cast %123 : vector<1x1x8x256xf32> to vector<8x256xf32>
    %125 = arith.subf %122, %124 : vector<8x256xf32>
    %126 = math.absf %125 : vector<8x256xf32>
    %cst_70 = arith.constant 0.111111112 : f32
    %127 = vector.broadcast %cst_70 : f32 to vector<8x256xf32>
    %128 = arith.cmpf ole, %126, %127 : vector<8x256xf32>
    %cst_71 = arith.constant 4.500000e+00 : f32
    %129 = vector.broadcast %cst_71 : f32 to vector<8x256xf32>
    %130 = arith.mulf %129, %126 : vector<8x256xf32>
    %131 = arith.mulf %130, %126 : vector<8x256xf32>
    %cst_72 = arith.constant 0.055555556 : f32
    %132 = vector.broadcast %cst_72 : f32 to vector<8x256xf32>
    %133 = arith.subf %126, %132 : vector<8x256xf32>
    %134 = arith.select %128, %131, %133 : vector<8x256xi1>, vector<8x256xf32>
    %135 = arith.addf %112, %134 : vector<8x256xf32>
    %c0_73 = arith.constant 0 : index
    %c9 = arith.constant 9 : index
    %136 = memref.load %arg2[%c0_73, %c9] : memref<2x13xf32, #tpu.memory_space<smem>>
    %c9_74 = arith.constant 9 : index
    %c0_75 = arith.constant 0 : index
    %c0_76 = arith.constant 0 : index
    %137 = vector.load %arg1[%c9_74, %c0_75, %c0_76] : memref<16x8x256xf32, #tpu.memory_space<vmem>>, vector<1x8x256xf32>
    %138 = vector.shape_cast %137 : vector<1x8x256xf32> to vector<8x256xf32>
    %139 = vector.broadcast %136 : f32 to vector<8x256xf32>
    %140 = arith.subf %139, %138 : vector<8x256xf32>
    %c12 = arith.constant 12 : index
    %c0_77 = arith.constant 0 : index
    %c0_78 = arith.constant 0 : index
    %141 = vector.load %arg1[%c12, %c0_77, %c0_78] : memref<16x8x256xf32, #tpu.memory_space<vmem>>, vector<1x8x256xf32>
    %142 = vector.shape_cast %141 : vector<1x8x256xf32> to vector<8x256xf32>
    %143 = arith.mulf %140, %142 : vector<8x256xf32>
    %cst_79 = arith.constant 1.000000e+01 : f32
    %144 = vector.broadcast %cst_79 : f32 to vector<8x256xf32>
    %145 = arith.mulf %143, %144 : vector<8x256xf32>
    %c2_80 = arith.constant 2 : index
    %c0_81 = arith.constant 0 : index
    %c0_82 = arith.constant 0 : index
    %c0_83 = arith.constant 0 : index
    %146 = vector.load %arg4[%c2_80, %c0_81, %c0_82, %c0_83] : memref<6x2x8x256xf32, #tpu.memory_space<vmem>>, vector<1x1x8x256xf32>
    %147 = vector.shape_cast %146 : vector<1x1x8x256xf32> to vector<8x256xf32>
    %148 = arith.subf %145, %147 : vector<8x256xf32>
    %149 = math.absf %148 : vector<8x256xf32>
    %cst_84 = arith.constant 0.111111112 : f32
    %150 = vector.broadcast %cst_84 : f32 to vector<8x256xf32>
    %151 = arith.cmpf ole, %149, %150 : vector<8x256xf32>
    %cst_85 = arith.constant 4.500000e+00 : f32
    %152 = vector.broadcast %cst_85 : f32 to vector<8x256xf32>
    %153 = arith.mulf %152, %149 : vector<8x256xf32>
    %154 = arith.mulf %153, %149 : vector<8x256xf32>
    %cst_86 = arith.constant 0.055555556 : f32
    %155 = vector.broadcast %cst_86 : f32 to vector<8x256xf32>
    %156 = arith.subf %149, %155 : vector<8x256xf32>
    %157 = arith.select %151, %154, %156 : vector<8x256xi1>, vector<8x256xf32>
    %158 = arith.addf %135, %157 : vector<8x256xf32>
    %c0_87 = arith.constant 0 : index
    %c10_88 = arith.constant 10 : index
    %159 = memref.load %arg2[%c0_87, %c10_88] : memref<2x13xf32, #tpu.memory_space<smem>>
    %c13 = arith.constant 13 : index
    %c0_89 = arith.constant 0 : index
    %c0_90 = arith.constant 0 : index
    %160 = vector.load %arg1[%c13, %c0_89, %c0_90] : memref<16x8x256xf32, #tpu.memory_space<vmem>>, vector<1x8x256xf32>
    %161 = vector.shape_cast %160 : vector<1x8x256xf32> to vector<8x256xf32>
    %162 = vector.broadcast %159 : f32 to vector<8x256xf32>
    %163 = arith.subf %162, %161 : vector<8x256xf32>
    %cst_91 = arith.constant 1.000000e+01 : f32
    %164 = vector.broadcast %cst_91 : f32 to vector<8x256xf32>
    %165 = arith.mulf %163, %164 : vector<8x256xf32>
    %c3_92 = arith.constant 3 : index
    %c0_93 = arith.constant 0 : index
    %c0_94 = arith.constant 0 : index
    %c0_95 = arith.constant 0 : index
    %166 = vector.load %arg4[%c3_92, %c0_93, %c0_94, %c0_95] : memref<6x2x8x256xf32, #tpu.memory_space<vmem>>, vector<1x1x8x256xf32>
    %167 = vector.shape_cast %166 : vector<1x1x8x256xf32> to vector<8x256xf32>
    %168 = arith.subf %165, %167 : vector<8x256xf32>
    %169 = math.absf %168 : vector<8x256xf32>
    %cst_96 = arith.constant 0.111111112 : f32
    %170 = vector.broadcast %cst_96 : f32 to vector<8x256xf32>
    %171 = arith.cmpf ole, %169, %170 : vector<8x256xf32>
    %cst_97 = arith.constant 4.500000e+00 : f32
    %172 = vector.broadcast %cst_97 : f32 to vector<8x256xf32>
    %173 = arith.mulf %172, %169 : vector<8x256xf32>
    %174 = arith.mulf %173, %169 : vector<8x256xf32>
    %cst_98 = arith.constant 0.055555556 : f32
    %175 = vector.broadcast %cst_98 : f32 to vector<8x256xf32>
    %176 = arith.subf %169, %175 : vector<8x256xf32>
    %177 = arith.select %171, %174, %176 : vector<8x256xi1>, vector<8x256xf32>
    %178 = arith.addf %158, %177 : vector<8x256xf32>
    %c0_99 = arith.constant 0 : index
    %c11_100 = arith.constant 11 : index
    %179 = memref.load %arg2[%c0_99, %c11_100] : memref<2x13xf32, #tpu.memory_space<smem>>
    %c14 = arith.constant 14 : index
    %c0_101 = arith.constant 0 : index
    %c0_102 = arith.constant 0 : index
    %180 = vector.load %arg1[%c14, %c0_101, %c0_102] : memref<16x8x256xf32, #tpu.memory_space<vmem>>, vector<1x8x256xf32>
    %181 = vector.shape_cast %180 : vector<1x8x256xf32> to vector<8x256xf32>
    %182 = vector.broadcast %179 : f32 to vector<8x256xf32>
    %183 = arith.subf %182, %181 : vector<8x256xf32>
    %cst_103 = arith.constant 1.000000e+01 : f32
    %184 = vector.broadcast %cst_103 : f32 to vector<8x256xf32>
    %185 = arith.mulf %183, %184 : vector<8x256xf32>
    %c4_104 = arith.constant 4 : index
    %c0_105 = arith.constant 0 : index
    %c0_106 = arith.constant 0 : index
    %c0_107 = arith.constant 0 : index
    %186 = vector.load %arg4[%c4_104, %c0_105, %c0_106, %c0_107] : memref<6x2x8x256xf32, #tpu.memory_space<vmem>>, vector<1x1x8x256xf32>
    %187 = vector.shape_cast %186 : vector<1x1x8x256xf32> to vector<8x256xf32>
    %188 = arith.subf %185, %187 : vector<8x256xf32>
    %189 = math.absf %188 : vector<8x256xf32>
    %cst_108 = arith.constant 0.111111112 : f32
    %190 = vector.broadcast %cst_108 : f32 to vector<8x256xf32>
    %191 = arith.cmpf ole, %189, %190 : vector<8x256xf32>
    %cst_109 = arith.constant 4.500000e+00 : f32
    %192 = vector.broadcast %cst_109 : f32 to vector<8x256xf32>
    %193 = arith.mulf %192, %189 : vector<8x256xf32>
    %194 = arith.mulf %193, %189 : vector<8x256xf32>
    %cst_110 = arith.constant 0.055555556 : f32
    %195 = vector.broadcast %cst_110 : f32 to vector<8x256xf32>
    %196 = arith.subf %189, %195 : vector<8x256xf32>
    %197 = arith.select %191, %194, %196 : vector<8x256xi1>, vector<8x256xf32>
    %198 = arith.addf %178, %197 : vector<8x256xf32>
    %c0_111 = arith.constant 0 : index
    %c12_112 = arith.constant 12 : index
    %199 = memref.load %arg2[%c0_111, %c12_112] : memref<2x13xf32, #tpu.memory_space<smem>>
    %c15 = arith.constant 15 : index
    %c0_113 = arith.constant 0 : index
    %c0_114 = arith.constant 0 : index
    %200 = vector.load %arg1[%c15, %c0_113, %c0_114] : memref<16x8x256xf32, #tpu.memory_space<vmem>>, vector<1x8x256xf32>
    %201 = vector.shape_cast %200 : vector<1x8x256xf32> to vector<8x256xf32>
    %202 = vector.broadcast %199 : f32 to vector<8x256xf32>
    %203 = arith.subf %202, %201 : vector<8x256xf32>
    %cst_115 = arith.constant 1.000000e+01 : f32
    %204 = vector.broadcast %cst_115 : f32 to vector<8x256xf32>
    %205 = arith.mulf %203, %204 : vector<8x256xf32>
    %c5_116 = arith.constant 5 : index
    %c0_117 = arith.constant 0 : index
    %c0_118 = arith.constant 0 : index
    %c0_119 = arith.constant 0 : index
    %206 = vector.load %arg4[%c5_116, %c0_117, %c0_118, %c0_119] : memref<6x2x8x256xf32, #tpu.memory_space<vmem>>, vector<1x1x8x256xf32>
    %207 = vector.shape_cast %206 : vector<1x1x8x256xf32> to vector<8x256xf32>
    %208 = arith.subf %205, %207 : vector<8x256xf32>
    %209 = math.absf %208 : vector<8x256xf32>
    %cst_120 = arith.constant 0.111111112 : f32
    %210 = vector.broadcast %cst_120 : f32 to vector<8x256xf32>
    %211 = arith.cmpf ole, %209, %210 : vector<8x256xf32>
    %cst_121 = arith.constant 4.500000e+00 : f32
    %212 = vector.broadcast %cst_121 : f32 to vector<8x256xf32>
    %213 = arith.mulf %212, %209 : vector<8x256xf32>
    %214 = arith.mulf %213, %209 : vector<8x256xf32>
    %cst_122 = arith.constant 0.055555556 : f32
    %215 = vector.broadcast %cst_122 : f32 to vector<8x256xf32>
    %216 = arith.subf %209, %215 : vector<8x256xf32>
    %217 = arith.select %211, %214, %216 : vector<8x256xi1>, vector<8x256xf32>
    %218 = arith.addf %198, %217 : vector<8x256xf32>
    %cst_123 = arith.constant 0.000000e+00 : f32
    %219 = vector.broadcast %cst_123 : f32 to vector<8x256xf32>
    %220 = arith.select %71, %218, %219 : vector<8x256xi1>, vector<8x256xf32>
    %221 = arith.extui %73 : vector<8x256xi1> to vector<8x256xi32>
    %222 = arith.sitofp %221 : vector<8x256xi32> to vector<8x256xf32>
    %223 = arith.extui %71 : vector<8x256xi1> to vector<8x256xi32>
    %224 = arith.sitofp %223 : vector<8x256xi32> to vector<8x256xf32>
    %c0_124 = arith.constant 0 : index
    %c0_125 = arith.constant 0 : index
    %c0_126 = arith.constant 0 : index
    %225 = vector.load %arg7[%c0_124, %c0_125, %c0_126] : memref<2x8x128xf32, #tpu.memory_space<vmem>>, vector<1x8x128xf32>
    %226 = vector.shape_cast %225 : vector<1x8x128xf32> to vector<8x128xf32>
    %227 = vector.extract_strided_slice %88 {offsets = [0, 0], sizes = [8, 128], strides = [1, 1]} : vector<8x256xf32> to vector<8x128xf32>
    %228 = vector.extract_strided_slice %88 {offsets = [0, 128], sizes = [8, 128], strides = [1, 1]} : vector<8x256xf32> to vector<8x128xf32>
    %229 = arith.addf %227, %228 : vector<8x128xf32>
    %230 = arith.addf %226, %229 : vector<8x128xf32>
    %c0_127 = arith.constant 0 : index
    %c0_128 = arith.constant 0 : index
    %c0_129 = arith.constant 0 : index
    %231 = vector.load %arg7[%c0_127, %c0_128, %c0_129] : memref<2x8x128xf32, #tpu.memory_space<vmem>>, vector<1x8x128xf32>
    %232 = vector.shape_cast %231 : vector<1x8x128xf32> to vector<8x128xf32>
    %233 = vector.shape_cast %230 : vector<8x128xf32> to vector<1x8x128xf32>
    tpu.vector_store %arg7[%c0_127, %c0_128, %c0_129], %233 {strides = array<i32>} : memref<2x8x128xf32, #tpu.memory_space<vmem>>, vector<1x8x128xf32>,
    %c0_130 = arith.constant 0 : index
    %c0_131 = arith.constant 0 : index
    %c0_132 = arith.constant 0 : index
    %234 = vector.load %arg8[%c0_130, %c0_131, %c0_132] : memref<2x8x128xf32, #tpu.memory_space<vmem>>, vector<1x8x128xf32>
    %235 = vector.shape_cast %234 : vector<1x8x128xf32> to vector<8x128xf32>
    %236 = vector.extract_strided_slice %222 {offsets = [0, 0], sizes = [8, 128], strides = [1, 1]} : vector<8x256xf32> to vector<8x128xf32>
    %237 = vector.extract_strided_slice %222 {offsets = [0, 128], sizes = [8, 128], strides = [1, 1]} : vector<8x256xf32> to vector<8x128xf32>
    %238 = arith.addf %236, %237 : vector<8x128xf32>
    %239 = arith.addf %235, %238 : vector<8x128xf32>
    %c0_133 = arith.constant 0 : index
    %c0_134 = arith.constant 0 : index
    %c0_135 = arith.constant 0 : index
    %240 = vector.load %arg8[%c0_133, %c0_134, %c0_135] : memref<2x8x128xf32, #tpu.memory_space<vmem>>, vector<1x8x128xf32>
    %241 = vector.shape_cast %240 : vector<1x8x128xf32> to vector<8x128xf32>
    %242 = vector.shape_cast %239 : vector<8x128xf32> to vector<1x8x128xf32>
    tpu.vector_store %arg8[%c0_133, %c0_134, %c0_135], %242 {strides = array<i32>} : memref<2x8x128xf32, #tpu.memory_space<vmem>>, vector<1x8x128xf32>,
    %c0_136 = arith.constant 0 : index
    %c0_137 = arith.constant 0 : index
    %c0_138 = arith.constant 0 : index
    %243 = vector.load %arg9[%c0_136, %c0_137, %c0_138] : memref<2x8x128xf32, #tpu.memory_space<vmem>>, vector<1x8x128xf32>
    %244 = vector.shape_cast %243 : vector<1x8x128xf32> to vector<8x128xf32>
    %245 = vector.extract_strided_slice %224 {offsets = [0, 0], sizes = [8, 128], strides = [1, 1]} : vector<8x256xf32> to vector<8x128xf32>
    %246 = vector.extract_strided_slice %224 {offsets = [0, 128], sizes = [8, 128], strides = [1, 1]} : vector<8x256xf32> to vector<8x128xf32>
    %247 = arith.addf %245, %246 : vector<8x128xf32>
    %248 = arith.addf %244, %247 : vector<8x128xf32>
    %c0_139 = arith.constant 0 : index
    %c0_140 = arith.constant 0 : index
    %c0_141 = arith.constant 0 : index
    %249 = vector.load %arg9[%c0_139, %c0_140, %c0_141] : memref<2x8x128xf32, #tpu.memory_space<vmem>>, vector<1x8x128xf32>
    %250 = vector.shape_cast %249 : vector<1x8x128xf32> to vector<8x128xf32>
    %251 = vector.shape_cast %248 : vector<8x128xf32> to vector<1x8x128xf32>
    tpu.vector_store %arg9[%c0_139, %c0_140, %c0_141], %251 {strides = array<i32>} : memref<2x8x128xf32, #tpu.memory_space<vmem>>, vector<1x8x128xf32>,
    %c0_142 = arith.constant 0 : index
    %c0_143 = arith.constant 0 : index
    %c0_144 = arith.constant 0 : index
    %252 = vector.load %arg10[%c0_142, %c0_143, %c0_144] : memref<2x8x128xf32, #tpu.memory_space<vmem>>, vector<1x8x128xf32>
    %253 = vector.shape_cast %252 : vector<1x8x128xf32> to vector<8x128xf32>
    %254 = vector.extract_strided_slice %220 {offsets = [0, 0], sizes = [8, 128], strides = [1, 1]} : vector<8x256xf32> to vector<8x128xf32>
    %255 = vector.extract_strided_slice %220 {offsets = [0, 128], sizes = [8, 128], strides = [1, 1]} : vector<8x256xf32> to vector<8x128xf32>
    %256 = arith.addf %254, %255 : vector<8x128xf32>
    %257 = arith.addf %253, %256 : vector<8x128xf32>
    %c0_145 = arith.constant 0 : index
    %c0_146 = arith.constant 0 : index
    %c0_147 = arith.constant 0 : index
    %258 = vector.load %arg10[%c0_145, %c0_146, %c0_147] : memref<2x8x128xf32, #tpu.memory_space<vmem>>, vector<1x8x128xf32>
    %259 = vector.shape_cast %258 : vector<1x8x128xf32> to vector<8x128xf32>
    %260 = vector.shape_cast %257 : vector<8x128xf32> to vector<1x8x128xf32>
    tpu.vector_store %arg10[%c0_145, %c0_146, %c0_147], %260 {strides = array<i32>} : memref<2x8x128xf32, #tpu.memory_space<vmem>>, vector<1x8x128xf32>,
    %c1_148 = arith.constant 1 : index
    %c0_149 = arith.constant 0 : index
    %c0_150 = arith.constant 0 : index
    %261 = vector.load %arg3[%c1_148, %c0_149, %c0_150] : memref<2x8x256xf32, #tpu.memory_space<vmem>>, vector<1x8x256xf32>
    %262 = vector.shape_cast %261 : vector<1x8x256xf32> to vector<8x256xf32>
    %cst_151 = arith.constant 9.99999974E-5 : f32
    %cst_152 = arith.constant 0.999899983 : f32
    %263 = vector.broadcast %cst_151 : f32 to vector<8x256xf32>
    %264 = arith.maximumf %263, %262 : vector<8x256xf32>
    %265 = vector.broadcast %cst_152 : f32 to vector<8x256xf32>
    %266 = arith.minimumf %265, %264 : vector<8x256xf32>
    %c3_153 = arith.constant 3 : index
    %c0_154 = arith.constant 0 : index
    %c0_155 = arith.constant 0 : index
    %267 = vector.load %arg1[%c3_153, %c0_154, %c0_155] : memref<16x8x256xf32, #tpu.memory_space<vmem>>, vector<1x8x256xf32>
    %268 = vector.shape_cast %267 : vector<1x8x256xf32> to vector<8x256xf32>
    %c1_156 = arith.constant 1 : index
    %c3_157 = arith.constant 3 : index
    %269 = memref.load %arg2[%c1_156, %c3_157] : memref<2x13xf32, #tpu.memory_space<smem>>
    %270 = vector.broadcast %269 : f32 to vector<8x256xf32>
    %271 = arith.minimumf %268, %270 : vector<8x256xf32>
    %c0_158 = arith.constant 0 : index
    %c0_159 = arith.constant 0 : index
    %c0_160 = arith.constant 0 : index
    %272 = vector.load %arg1[%c0_158, %c0_159, %c0_160] : memref<16x8x256xf32, #tpu.memory_space<vmem>>, vector<1x8x256xf32>
    %273 = vector.shape_cast %272 : vector<1x8x256xf32> to vector<8x256xf32>
    %c1_161 = arith.constant 1 : index
    %c0_162 = arith.constant 0 : index
    %274 = memref.load %arg2[%c1_161, %c0_162] : memref<2x13xf32, #tpu.memory_space<smem>>
    %275 = vector.broadcast %274 : f32 to vector<8x256xf32>
    %276 = arith.maximumf %273, %275 : vector<8x256xf32>
    %277 = arith.subf %271, %276 : vector<8x256xf32>
    %cst_163 = arith.constant 0.000000e+00 : f32
    %278 = vector.broadcast %cst_163 : f32 to vector<8x256xf32>
    %279 = arith.maximumf %277, %278 : vector<8x256xf32>
    %c4_164 = arith.constant 4 : index
    %c0_165 = arith.constant 0 : index
    %c0_166 = arith.constant 0 : index
    %280 = vector.load %arg1[%c4_164, %c0_165, %c0_166] : memref<16x8x256xf32, #tpu.memory_space<vmem>>, vector<1x8x256xf32>
    %281 = vector.shape_cast %280 : vector<1x8x256xf32> to vector<8x256xf32>
    %c1_167 = arith.constant 1 : index
    %c4_168 = arith.constant 4 : index
    %282 = memref.load %arg2[%c1_167, %c4_168] : memref<2x13xf32, #tpu.memory_space<smem>>
    %283 = vector.broadcast %282 : f32 to vector<8x256xf32>
    %284 = arith.minimumf %281, %283 : vector<8x256xf32>
    %c1_169 = arith.constant 1 : index
    %c0_170 = arith.constant 0 : index
    %c0_171 = arith.constant 0 : index
    %285 = vector.load %arg1[%c1_169, %c0_170, %c0_171] : memref<16x8x256xf32, #tpu.memory_space<vmem>>, vector<1x8x256xf32>
    %286 = vector.shape_cast %285 : vector<1x8x256xf32> to vector<8x256xf32>
    %c1_172 = arith.constant 1 : index
    %c1_173 = arith.constant 1 : index
    %287 = memref.load %arg2[%c1_172, %c1_173] : memref<2x13xf32, #tpu.memory_space<smem>>
    %288 = vector.broadcast %287 : f32 to vector<8x256xf32>
    %289 = arith.maximumf %286, %288 : vector<8x256xf32>
    %290 = arith.subf %284, %289 : vector<8x256xf32>
    %cst_174 = arith.constant 0.000000e+00 : f32
    %291 = vector.broadcast %cst_174 : f32 to vector<8x256xf32>
    %292 = arith.maximumf %290, %291 : vector<8x256xf32>
    %293 = arith.mulf %279, %292 : vector<8x256xf32>
    %c5_175 = arith.constant 5 : index
    %c0_176 = arith.constant 0 : index
    %c0_177 = arith.constant 0 : index
    %294 = vector.load %arg1[%c5_175, %c0_176, %c0_177] : memref<16x8x256xf32, #tpu.memory_space<vmem>>, vector<1x8x256xf32>
    %295 = vector.shape_cast %294 : vector<1x8x256xf32> to vector<8x256xf32>
    %c1_178 = arith.constant 1 : index
    %c5_179 = arith.constant 5 : index
    %296 = memref.load %arg2[%c1_178, %c5_179] : memref<2x13xf32, #tpu.memory_space<smem>>
    %297 = vector.broadcast %296 : f32 to vector<8x256xf32>
    %298 = arith.minimumf %295, %297 : vector<8x256xf32>
    %c2_180 = arith.constant 2 : index
    %c0_181 = arith.constant 0 : index
    %c0_182 = arith.constant 0 : index
    %299 = vector.load %arg1[%c2_180, %c0_181, %c0_182] : memref<16x8x256xf32, #tpu.memory_space<vmem>>, vector<1x8x256xf32>
    %300 = vector.shape_cast %299 : vector<1x8x256xf32> to vector<8x256xf32>
    %c1_183 = arith.constant 1 : index
    %c2_184 = arith.constant 2 : index
    %301 = memref.load %arg2[%c1_183, %c2_184] : memref<2x13xf32, #tpu.memory_space<smem>>
    %302 = vector.broadcast %301 : f32 to vector<8x256xf32>
    %303 = arith.maximumf %300, %302 : vector<8x256xf32>
    %304 = arith.subf %298, %303 : vector<8x256xf32>
    %cst_185 = arith.constant 0.000000e+00 : f32
    %305 = vector.broadcast %cst_185 : f32 to vector<8x256xf32>
    %306 = arith.maximumf %304, %305 : vector<8x256xf32>
    %307 = arith.mulf %293, %306 : vector<8x256xf32>
    %c6_186 = arith.constant 6 : index
    %c0_187 = arith.constant 0 : index
    %c0_188 = arith.constant 0 : index
    %308 = vector.load %arg1[%c6_186, %c0_187, %c0_188] : memref<16x8x256xf32, #tpu.memory_space<vmem>>, vector<1x8x256xf32>
    %309 = vector.shape_cast %308 : vector<1x8x256xf32> to vector<8x256xf32>
    %c1_189 = arith.constant 1 : index
    %c6_190 = arith.constant 6 : index
    %310 = memref.load %arg2[%c1_189, %c6_190] : memref<2x13xf32, #tpu.memory_space<smem>>
    %311 = vector.broadcast %310 : f32 to vector<8x256xf32>
    %312 = arith.addf %309, %311 : vector<8x256xf32>
    %313 = arith.subf %312, %307 : vector<8x256xf32>
    %cst_191 = arith.constant 9.99999993E-9 : f32
    %314 = vector.broadcast %cst_191 : f32 to vector<8x256xf32>
    %315 = arith.maximumf %313, %314 : vector<8x256xf32>
    %316 = arith.divf %307, %315 : vector<8x256xf32>
    %cst_192 = arith.constant 5.000000e-01 : f32
    %317 = vector.broadcast %cst_192 : f32 to vector<8x256xf32>
    %318 = arith.cmpf oge, %316, %317 : vector<8x256xf32>
    %cst_193 = arith.constant 4.000000e-01 : f32
    %319 = vector.broadcast %cst_193 : f32 to vector<8x256xf32>
    %320 = arith.cmpf olt, %316, %319 : vector<8x256xf32>
    %321 = arith.ori %318, %320 : vector<8x256xi1>
    %322 = vector.broadcast %8 : vector<1x256xi1> to vector<8x256xi1>
    %323 = arith.andi %318, %322 : vector<8x256xi1>
    %324 = vector.broadcast %8 : vector<1x256xi1> to vector<8x256xi1>
    %325 = arith.andi %321, %324 : vector<8x256xi1>
    %cst_194 = arith.constant 1.000000e+00 : f32
    %326 = vector.broadcast %cst_194 : f32 to vector<8x256xf32>
    %327 = arith.subf %326, %266 : vector<8x256xf32>
    %328 = arith.select %323, %327, %266 : vector<8x256xi1>, vector<8x256xf32>
    %cst_195 = arith.constant 2.500000e-01 : f32
    %cst_196 = arith.constant 7.500000e-01 : f32
    %329 = vector.broadcast %cst_195 : f32 to vector<8x256xf32>
    %330 = vector.broadcast %cst_196 : f32 to vector<8x256xf32>
    %331 = arith.select %323, %329, %330 : vector<8x256xi1>, vector<8x256xf32>
    %332 = arith.mulf %331, %328 : vector<8x256xf32>
    %333 = arith.mulf %332, %328 : vector<8x256xf32>
    %cst_197 = arith.constant 0.000000e+00 : f32
    %334 = vector.broadcast %cst_197 : f32 to vector<8x256xf32>
    %335 = arith.subf %334, %333 : vector<8x256xf32>
    %336 = arith.select %323, %266, %327 : vector<8x256xi1>, vector<8x256xf32>
    %337 = math.log %336 : vector<8x256xf32>
    %338 = arith.mulf %335, %337 : vector<8x256xf32>
    %cst_198 = arith.constant 0.000000e+00 : f32
    %339 = vector.broadcast %cst_198 : f32 to vector<8x256xf32>
    %340 = arith.select %325, %338, %339 : vector<8x256xi1>, vector<8x256xf32>
    %cst_199 = arith.constant 0.000000e+00 : f32
    %341 = vector.broadcast %cst_199 : f32 to vector<8x256xf32>
    %c1_200 = arith.constant 1 : index
    %c7_201 = arith.constant 7 : index
    %342 = memref.load %arg2[%c1_200, %c7_201] : memref<2x13xf32, #tpu.memory_space<smem>>
    %c7_202 = arith.constant 7 : index
    %c0_203 = arith.constant 0 : index
    %c0_204 = arith.constant 0 : index
    %343 = vector.load %arg1[%c7_202, %c0_203, %c0_204] : memref<16x8x256xf32, #tpu.memory_space<vmem>>, vector<1x8x256xf32>
    %344 = vector.shape_cast %343 : vector<1x8x256xf32> to vector<8x256xf32>
    %345 = vector.broadcast %342 : f32 to vector<8x256xf32>
    %346 = arith.subf %345, %344 : vector<8x256xf32>
    %c10_205 = arith.constant 10 : index
    %c0_206 = arith.constant 0 : index
    %c0_207 = arith.constant 0 : index
    %347 = vector.load %arg1[%c10_205, %c0_206, %c0_207] : memref<16x8x256xf32, #tpu.memory_space<vmem>>, vector<1x8x256xf32>
    %348 = vector.shape_cast %347 : vector<1x8x256xf32> to vector<8x256xf32>
    %349 = arith.mulf %346, %348 : vector<8x256xf32>
    %cst_208 = arith.constant 1.000000e+01 : f32
    %350 = vector.broadcast %cst_208 : f32 to vector<8x256xf32>
    %351 = arith.mulf %349, %350 : vector<8x256xf32>
    %c0_209 = arith.constant 0 : index
    %c1_210 = arith.constant 1 : index
    %c0_211 = arith.constant 0 : index
    %c0_212 = arith.constant 0 : index
    %352 = vector.load %arg4[%c0_209, %c1_210, %c0_211, %c0_212] : memref<6x2x8x256xf32, #tpu.memory_space<vmem>>, vector<1x1x8x256xf32>
    %353 = vector.shape_cast %352 : vector<1x1x8x256xf32> to vector<8x256xf32>
    %354 = arith.subf %351, %353 : vector<8x256xf32>
    %355 = math.absf %354 : vector<8x256xf32>
    %cst_213 = arith.constant 0.111111112 : f32
    %356 = vector.broadcast %cst_213 : f32 to vector<8x256xf32>
    %357 = arith.cmpf ole, %355, %356 : vector<8x256xf32>
    %cst_214 = arith.constant 4.500000e+00 : f32
    %358 = vector.broadcast %cst_214 : f32 to vector<8x256xf32>
    %359 = arith.mulf %358, %355 : vector<8x256xf32>
    %360 = arith.mulf %359, %355 : vector<8x256xf32>
    %cst_215 = arith.constant 0.055555556 : f32
    %361 = vector.broadcast %cst_215 : f32 to vector<8x256xf32>
    %362 = arith.subf %355, %361 : vector<8x256xf32>
    %363 = arith.select %357, %360, %362 : vector<8x256xi1>, vector<8x256xf32>
    %364 = arith.addf %341, %363 : vector<8x256xf32>
    %c1_216 = arith.constant 1 : index
    %c8_217 = arith.constant 8 : index
    %365 = memref.load %arg2[%c1_216, %c8_217] : memref<2x13xf32, #tpu.memory_space<smem>>
    %c8_218 = arith.constant 8 : index
    %c0_219 = arith.constant 0 : index
    %c0_220 = arith.constant 0 : index
    %366 = vector.load %arg1[%c8_218, %c0_219, %c0_220] : memref<16x8x256xf32, #tpu.memory_space<vmem>>, vector<1x8x256xf32>
    %367 = vector.shape_cast %366 : vector<1x8x256xf32> to vector<8x256xf32>
    %368 = vector.broadcast %365 : f32 to vector<8x256xf32>
    %369 = arith.subf %368, %367 : vector<8x256xf32>
    %c11_221 = arith.constant 11 : index
    %c0_222 = arith.constant 0 : index
    %c0_223 = arith.constant 0 : index
    %370 = vector.load %arg1[%c11_221, %c0_222, %c0_223] : memref<16x8x256xf32, #tpu.memory_space<vmem>>, vector<1x8x256xf32>
    %371 = vector.shape_cast %370 : vector<1x8x256xf32> to vector<8x256xf32>
    %372 = arith.mulf %369, %371 : vector<8x256xf32>
    %cst_224 = arith.constant 1.000000e+01 : f32
    %373 = vector.broadcast %cst_224 : f32 to vector<8x256xf32>
    %374 = arith.mulf %372, %373 : vector<8x256xf32>
    %c1_225 = arith.constant 1 : index
    %c1_226 = arith.constant 1 : index
    %c0_227 = arith.constant 0 : index
    %c0_228 = arith.constant 0 : index
    %375 = vector.load %arg4[%c1_225, %c1_226, %c0_227, %c0_228] : memref<6x2x8x256xf32, #tpu.memory_space<vmem>>, vector<1x1x8x256xf32>
    %376 = vector.shape_cast %375 : vector<1x1x8x256xf32> to vector<8x256xf32>
    %377 = arith.subf %374, %376 : vector<8x256xf32>
    %378 = math.absf %377 : vector<8x256xf32>
    %cst_229 = arith.constant 0.111111112 : f32
    %379 = vector.broadcast %cst_229 : f32 to vector<8x256xf32>
    %380 = arith.cmpf ole, %378, %379 : vector<8x256xf32>
    %cst_230 = arith.constant 4.500000e+00 : f32
    %381 = vector.broadcast %cst_230 : f32 to vector<8x256xf32>
    %382 = arith.mulf %381, %378 : vector<8x256xf32>
    %383 = arith.mulf %382, %378 : vector<8x256xf32>
    %cst_231 = arith.constant 0.055555556 : f32
    %384 = vector.broadcast %cst_231 : f32 to vector<8x256xf32>
    %385 = arith.subf %378, %384 : vector<8x256xf32>
    %386 = arith.select %380, %383, %385 : vector<8x256xi1>, vector<8x256xf32>
    %387 = arith.addf %364, %386 : vector<8x256xf32>
    %c1_232 = arith.constant 1 : index
    %c9_233 = arith.constant 9 : index
    %388 = memref.load %arg2[%c1_232, %c9_233] : memref<2x13xf32, #tpu.memory_space<smem>>
    %c9_234 = arith.constant 9 : index
    %c0_235 = arith.constant 0 : index
    %c0_236 = arith.constant 0 : index
    %389 = vector.load %arg1[%c9_234, %c0_235, %c0_236] : memref<16x8x256xf32, #tpu.memory_space<vmem>>, vector<1x8x256xf32>
    %390 = vector.shape_cast %389 : vector<1x8x256xf32> to vector<8x256xf32>
    %391 = vector.broadcast %388 : f32 to vector<8x256xf32>
    %392 = arith.subf %391, %390 : vector<8x256xf32>
    %c12_237 = arith.constant 12 : index
    %c0_238 = arith.constant 0 : index
    %c0_239 = arith.constant 0 : index
    %393 = vector.load %arg1[%c12_237, %c0_238, %c0_239] : memref<16x8x256xf32, #tpu.memory_space<vmem>>, vector<1x8x256xf32>
    %394 = vector.shape_cast %393 : vector<1x8x256xf32> to vector<8x256xf32>
    %395 = arith.mulf %392, %394 : vector<8x256xf32>
    %cst_240 = arith.constant 1.000000e+01 : f32
    %396 = vector.broadcast %cst_240 : f32 to vector<8x256xf32>
    %397 = arith.mulf %395, %396 : vector<8x256xf32>
    %c2_241 = arith.constant 2 : index
    %c1_242 = arith.constant 1 : index
    %c0_243 = arith.constant 0 : index
    %c0_244 = arith.constant 0 : index
    %398 = vector.load %arg4[%c2_241, %c1_242, %c0_243, %c0_244] : memref<6x2x8x256xf32, #tpu.memory_space<vmem>>, vector<1x1x8x256xf32>
    %399 = vector.shape_cast %398 : vector<1x1x8x256xf32> to vector<8x256xf32>
    %400 = arith.subf %397, %399 : vector<8x256xf32>
    %401 = math.absf %400 : vector<8x256xf32>
    %cst_245 = arith.constant 0.111111112 : f32
    %402 = vector.broadcast %cst_245 : f32 to vector<8x256xf32>
    %403 = arith.cmpf ole, %401, %402 : vector<8x256xf32>
    %cst_246 = arith.constant 4.500000e+00 : f32
    %404 = vector.broadcast %cst_246 : f32 to vector<8x256xf32>
    %405 = arith.mulf %404, %401 : vector<8x256xf32>
    %406 = arith.mulf %405, %401 : vector<8x256xf32>
    %cst_247 = arith.constant 0.055555556 : f32
    %407 = vector.broadcast %cst_247 : f32 to vector<8x256xf32>
    %408 = arith.subf %401, %407 : vector<8x256xf32>
    %409 = arith.select %403, %406, %408 : vector<8x256xi1>, vector<8x256xf32>
    %410 = arith.addf %387, %409 : vector<8x256xf32>
    %c1_248 = arith.constant 1 : index
    %c10_249 = arith.constant 10 : index
    %411 = memref.load %arg2[%c1_248, %c10_249] : memref<2x13xf32, #tpu.memory_space<smem>>
    %c13_250 = arith.constant 13 : index
    %c0_251 = arith.constant 0 : index
    %c0_252 = arith.constant 0 : index
    %412 = vector.load %arg1[%c13_250, %c0_251, %c0_252] : memref<16x8x256xf32, #tpu.memory_space<vmem>>, vector<1x8x256xf32>
    %413 = vector.shape_cast %412 : vector<1x8x256xf32> to vector<8x256xf32>
    %414 = vector.broadcast %411 : f32 to vector<8x256xf32>
    %415 = arith.subf %414, %413 : vector<8x256xf32>
    %cst_253 = arith.constant 1.000000e+01 : f32
    %416 = vector.broadcast %cst_253 : f32 to vector<8x256xf32>
    %417 = arith.mulf %415, %416 : vector<8x256xf32>
    %c3_254 = arith.constant 3 : index
    %c1_255 = arith.constant 1 : index
    %c0_256 = arith.constant 0 : index
    %c0_257 = arith.constant 0 : index
    %418 = vector.load %arg4[%c3_254, %c1_255, %c0_256, %c0_257] : memref<6x2x8x256xf32, #tpu.memory_space<vmem>>, vector<1x1x8x256xf32>
    %419 = vector.shape_cast %418 : vector<1x1x8x256xf32> to vector<8x256xf32>
    %420 = arith.subf %417, %419 : vector<8x256xf32>
    %421 = math.absf %420 : vector<8x256xf32>
    %cst_258 = arith.constant 0.111111112 : f32
    %422 = vector.broadcast %cst_258 : f32 to vector<8x256xf32>
    %423 = arith.cmpf ole, %421, %422 : vector<8x256xf32>
    %cst_259 = arith.constant 4.500000e+00 : f32
    %424 = vector.broadcast %cst_259 : f32 to vector<8x256xf32>
    %425 = arith.mulf %424, %421 : vector<8x256xf32>
    %426 = arith.mulf %425, %421 : vector<8x256xf32>
    %cst_260 = arith.constant 0.055555556 : f32
    %427 = vector.broadcast %cst_260 : f32 to vector<8x256xf32>
    %428 = arith.subf %421, %427 : vector<8x256xf32>
    %429 = arith.select %423, %426, %428 : vector<8x256xi1>, vector<8x256xf32>
    %430 = arith.addf %410, %429 : vector<8x256xf32>
    %c1_261 = arith.constant 1 : index
    %c11_262 = arith.constant 11 : index
    %431 = memref.load %arg2[%c1_261, %c11_262] : memref<2x13xf32, #tpu.memory_space<smem>>
    %c14_263 = arith.constant 14 : index
    %c0_264 = arith.constant 0 : index
    %c0_265 = arith.constant 0 : index
    %432 = vector.load %arg1[%c14_263, %c0_264, %c0_265] : memref<16x8x256xf32, #tpu.memory_space<vmem>>, vector<1x8x256xf32>
    %433 = vector.shape_cast %432 : vector<1x8x256xf32> to vector<8x256xf32>
    %434 = vector.broadcast %431 : f32 to vector<8x256xf32>
    %435 = arith.subf %434, %433 : vector<8x256xf32>
    %cst_266 = arith.constant 1.000000e+01 : f32
    %436 = vector.broadcast %cst_266 : f32 to vector<8x256xf32>
    %437 = arith.mulf %435, %436 : vector<8x256xf32>
    %c4_267 = arith.constant 4 : index
    %c1_268 = arith.constant 1 : index
    %c0_269 = arith.constant 0 : index
    %c0_270 = arith.constant 0 : index
    %438 = vector.load %arg4[%c4_267, %c1_268, %c0_269, %c0_270] : memref<6x2x8x256xf32, #tpu.memory_space<vmem>>, vector<1x1x8x256xf32>
    %439 = vector.shape_cast %438 : vector<1x1x8x256xf32> to vector<8x256xf32>
    %440 = arith.subf %437, %439 : vector<8x256xf32>
    %441 = math.absf %440 : vector<8x256xf32>
    %cst_271 = arith.constant 0.111111112 : f32
    %442 = vector.broadcast %cst_271 : f32 to vector<8x256xf32>
    %443 = arith.cmpf ole, %441, %442 : vector<8x256xf32>
    %cst_272 = arith.constant 4.500000e+00 : f32
    %444 = vector.broadcast %cst_272 : f32 to vector<8x256xf32>
    %445 = arith.mulf %444, %441 : vector<8x256xf32>
    %446 = arith.mulf %445, %441 : vector<8x256xf32>
    %cst_273 = arith.constant 0.055555556 : f32
    %447 = vector.broadcast %cst_273 : f32 to vector<8x256xf32>
    %448 = arith.subf %441, %447 : vector<8x256xf32>
    %449 = arith.select %443, %446, %448 : vector<8x256xi1>, vector<8x256xf32>
    %450 = arith.addf %430, %449 : vector<8x256xf32>
    %c1_274 = arith.constant 1 : index
    %c12_275 = arith.constant 12 : index
    %451 = memref.load %arg2[%c1_274, %c12_275] : memref<2x13xf32, #tpu.memory_space<smem>>
    %c15_276 = arith.constant 15 : index
    %c0_277 = arith.constant 0 : index
    %c0_278 = arith.constant 0 : index
    %452 = vector.load %arg1[%c15_276, %c0_277, %c0_278] : memref<16x8x256xf32, #tpu.memory_space<vmem>>, vector<1x8x256xf32>
    %453 = vector.shape_cast %452 : vector<1x8x256xf32> to vector<8x256xf32>
    %454 = vector.broadcast %451 : f32 to vector<8x256xf32>
    %455 = arith.subf %454, %453 : vector<8x256xf32>
    %cst_279 = arith.constant 1.000000e+01 : f32
    %456 = vector.broadcast %cst_279 : f32 to vector<8x256xf32>
    %457 = arith.mulf %455, %456 : vector<8x256xf32>
    %c5_280 = arith.constant 5 : index
    %c1_281 = arith.constant 1 : index
    %c0_282 = arith.constant 0 : index
    %c0_283 = arith.constant 0 : index
    %458 = vector.load %arg4[%c5_280, %c1_281, %c0_282, %c0_283] : memref<6x2x8x256xf32, #tpu.memory_space<vmem>>, vector<1x1x8x256xf32>
    %459 = vector.shape_cast %458 : vector<1x1x8x256xf32> to vector<8x256xf32>
    %460 = arith.subf %457, %459 : vector<8x256xf32>
    %461 = math.absf %460 : vector<8x256xf32>
    %cst_284 = arith.constant 0.111111112 : f32
    %462 = vector.broadcast %cst_284 : f32 to vector<8x256xf32>
    %463 = arith.cmpf ole, %461, %462 : vector<8x256xf32>
    %cst_285 = arith.constant 4.500000e+00 : f32
    %464 = vector.broadcast %cst_285 : f32 to vector<8x256xf32>
    %465 = arith.mulf %464, %461 : vector<8x256xf32>
    %466 = arith.mulf %465, %461 : vector<8x256xf32>
    %cst_286 = arith.constant 0.055555556 : f32
    %467 = vector.broadcast %cst_286 : f32 to vector<8x256xf32>
    %468 = arith.subf %461, %467 : vector<8x256xf32>
    %469 = arith.select %463, %466, %468 : vector<8x256xi1>, vector<8x256xf32>
    %470 = arith.addf %450, %469 : vector<8x256xf32>
    %cst_287 = arith.constant 0.000000e+00 : f32
    %471 = vector.broadcast %cst_287 : f32 to vector<8x256xf32>
    %472 = arith.select %323, %470, %471 : vector<8x256xi1>, vector<8x256xf32>
    %473 = arith.extui %325 : vector<8x256xi1> to vector<8x256xi32>
    %474 = arith.sitofp %473 : vector<8x256xi32> to vector<8x256xf32>
    %475 = arith.extui %323 : vector<8x256xi1> to vector<8x256xi32>
    %476 = arith.sitofp %475 : vector<8x256xi32> to vector<8x256xf32>
    %c1_288 = arith.constant 1 : index
    %c0_289 = arith.constant 0 : index
    %c0_290 = arith.constant 0 : index
    %477 = vector.load %arg7[%c1_288, %c0_289, %c0_290] : memref<2x8x128xf32, #tpu.memory_space<vmem>>, vector<1x8x128xf32>
    %478 = vector.shape_cast %477 : vector<1x8x128xf32> to vector<8x128xf32>
    %479 = vector.extract_strided_slice %340 {offsets = [0, 0], sizes = [8, 128], strides = [1, 1]} : vector<8x256xf32> to vector<8x128xf32>
    %480 = vector.extract_strided_slice %340 {offsets = [0, 128], sizes = [8, 128], strides = [1, 1]} : vector<8x256xf32> to vector<8x128xf32>
    %481 = arith.addf %479, %480 : vector<8x128xf32>
    %482 = arith.addf %478, %481 : vector<8x128xf32>
    %c1_291 = arith.constant 1 : index
    %c0_292 = arith.constant 0 : index
    %c0_293 = arith.constant 0 : index
    %483 = vector.load %arg7[%c1_291, %c0_292, %c0_293] : memref<2x8x128xf32, #tpu.memory_space<vmem>>, vector<1x8x128xf32>
    %484 = vector.shape_cast %483 : vector<1x8x128xf32> to vector<8x128xf32>
    %485 = vector.shape_cast %482 : vector<8x128xf32> to vector<1x8x128xf32>
    tpu.vector_store %arg7[%c1_291, %c0_292, %c0_293], %485 {strides = array<i32>} : memref<2x8x128xf32, #tpu.memory_space<vmem>>, vector<1x8x128xf32>,
    %c1_294 = arith.constant 1 : index
    %c0_295 = arith.constant 0 : index
    %c0_296 = arith.constant 0 : index
    %486 = vector.load %arg8[%c1_294, %c0_295, %c0_296] : memref<2x8x128xf32, #tpu.memory_space<vmem>>, vector<1x8x128xf32>
    %487 = vector.shape_cast %486 : vector<1x8x128xf32> to vector<8x128xf32>
    %488 = vector.extract_strided_slice %474 {offsets = [0, 0], sizes = [8, 128], strides = [1, 1]} : vector<8x256xf32> to vector<8x128xf32>
    %489 = vector.extract_strided_slice %474 {offsets = [0, 128], sizes = [8, 128], strides = [1, 1]} : vector<8x256xf32> to vector<8x128xf32>
    %490 = arith.addf %488, %489 : vector<8x128xf32>
    %491 = arith.addf %487, %490 : vector<8x128xf32>
    %c1_297 = arith.constant 1 : index
    %c0_298 = arith.constant 0 : index
    %c0_299 = arith.constant 0 : index
    %492 = vector.load %arg8[%c1_297, %c0_298, %c0_299] : memref<2x8x128xf32, #tpu.memory_space<vmem>>, vector<1x8x128xf32>
    %493 = vector.shape_cast %492 : vector<1x8x128xf32> to vector<8x128xf32>
    %494 = vector.shape_cast %491 : vector<8x128xf32> to vector<1x8x128xf32>
    tpu.vector_store %arg8[%c1_297, %c0_298, %c0_299], %494 {strides = array<i32>} : memref<2x8x128xf32, #tpu.memory_space<vmem>>, vector<1x8x128xf32>,
    %c1_300 = arith.constant 1 : index
    %c0_301 = arith.constant 0 : index
    %c0_302 = arith.constant 0 : index
    %495 = vector.load %arg9[%c1_300, %c0_301, %c0_302] : memref<2x8x128xf32, #tpu.memory_space<vmem>>, vector<1x8x128xf32>
    %496 = vector.shape_cast %495 : vector<1x8x128xf32> to vector<8x128xf32>
    %497 = vector.extract_strided_slice %476 {offsets = [0, 0], sizes = [8, 128], strides = [1, 1]} : vector<8x256xf32> to vector<8x128xf32>
    %498 = vector.extract_strided_slice %476 {offsets = [0, 128], sizes = [8, 128], strides = [1, 1]} : vector<8x256xf32> to vector<8x128xf32>
    %499 = arith.addf %497, %498 : vector<8x128xf32>
    %500 = arith.addf %496, %499 : vector<8x128xf32>
    %c1_303 = arith.constant 1 : index
    %c0_304 = arith.constant 0 : index
    %c0_305 = arith.constant 0 : index
    %501 = vector.load %arg9[%c1_303, %c0_304, %c0_305] : memref<2x8x128xf32, #tpu.memory_space<vmem>>, vector<1x8x128xf32>
    %502 = vector.shape_cast %501 : vector<1x8x128xf32> to vector<8x128xf32>
    %503 = vector.shape_cast %500 : vector<8x128xf32> to vector<1x8x128xf32>
    tpu.vector_store %arg9[%c1_303, %c0_304, %c0_305], %503 {strides = array<i32>} : memref<2x8x128xf32, #tpu.memory_space<vmem>>, vector<1x8x128xf32>,
    %c1_306 = arith.constant 1 : index
    %c0_307 = arith.constant 0 : index
    %c0_308 = arith.constant 0 : index
    %504 = vector.load %arg10[%c1_306, %c0_307, %c0_308] : memref<2x8x128xf32, #tpu.memory_space<vmem>>, vector<1x8x128xf32>
    %505 = vector.shape_cast %504 : vector<1x8x128xf32> to vector<8x128xf32>
    %506 = vector.extract_strided_slice %472 {offsets = [0, 0], sizes = [8, 128], strides = [1, 1]} : vector<8x256xf32> to vector<8x128xf32>
    %507 = vector.extract_strided_slice %472 {offsets = [0, 128], sizes = [8, 128], strides = [1, 1]} : vector<8x256xf32> to vector<8x128xf32>
    %508 = arith.addf %506, %507 : vector<8x128xf32>
    %509 = arith.addf %505, %508 : vector<8x128xf32>
    %c1_309 = arith.constant 1 : index
    %c0_310 = arith.constant 0 : index
    %c0_311 = arith.constant 0 : index
    %510 = vector.load %arg10[%c1_309, %c0_310, %c0_311] : memref<2x8x128xf32, #tpu.memory_space<vmem>>, vector<1x8x128xf32>
    %511 = vector.shape_cast %510 : vector<1x8x128xf32> to vector<8x128xf32>
    %512 = vector.shape_cast %509 : vector<8x128xf32> to vector<1x8x128xf32>
    tpu.vector_store %arg10[%c1_309, %c0_310, %c0_311], %512 {strides = array<i32>} : memref<2x8x128xf32, #tpu.memory_space<vmem>>, vector<1x8x128xf32>,
    %c2_i32 = arith.constant 2 : i32
    %513 = arith.cmpi eq, %arg0, %c2_i32 : i32
    %514 = arith.extui %513 : i1 to i32
    %c0_i32_312 = arith.constant 0 : i32
    %515 = arith.cmpi ne, %514, %c0_i32_312 : i32
    scf.if %515 {
      %c0_313 = arith.constant 0 : index
      %c0_314 = arith.constant 0 : index
      %c0_315 = arith.constant 0 : index
      %516 = vector.load %arg7[%c0_313, %c0_314, %c0_315] : memref<2x8x128xf32, #tpu.memory_space<vmem>>, vector<1x8x128xf32>
      %517 = vector.shape_cast %516 : vector<1x8x128xf32> to vector<8x128xf32>
      %518 = vector.shape_cast %517 : vector<8x128xf32> to vector<1x8x128xf32>
      %cst_316 = arith.constant dense<0.000000e+00> : vector<1xf32>
      %519 = vector.multi_reduction <add>, %518, %cst_316 [1, 2] : vector<1x8x128xf32> to vector<1xf32>
      %520 = vector.shape_cast %519 : vector<1xf32> to vector<1x1x1xf32>
      %521 = vector.extract %520[0, 0, 0] : f32 from vector<1x1x1xf32>
      %c0_317 = arith.constant 0 : index
      %c0_318 = arith.constant 0 : index
      %c0_319 = arith.constant 0 : index
      %522 = vector.load %arg8[%c0_317, %c0_318, %c0_319] : memref<2x8x128xf32, #tpu.memory_space<vmem>>, vector<1x8x128xf32>
      %523 = vector.shape_cast %522 : vector<1x8x128xf32> to vector<8x128xf32>
      %524 = vector.shape_cast %523 : vector<8x128xf32> to vector<1x8x128xf32>
      %cst_320 = arith.constant dense<0.000000e+00> : vector<1xf32>
      %525 = vector.multi_reduction <add>, %524, %cst_320 [1, 2] : vector<1x8x128xf32> to vector<1xf32>
      %526 = vector.shape_cast %525 : vector<1xf32> to vector<1x1x1xf32>
      %527 = vector.extract %526[0, 0, 0] : f32 from vector<1x1x1xf32>
      %c0_321 = arith.constant 0 : index
      %c0_322 = arith.constant 0 : index
      %c0_323 = arith.constant 0 : index
      %528 = vector.load %arg9[%c0_321, %c0_322, %c0_323] : memref<2x8x128xf32, #tpu.memory_space<vmem>>, vector<1x8x128xf32>
      %529 = vector.shape_cast %528 : vector<1x8x128xf32> to vector<8x128xf32>
      %530 = vector.shape_cast %529 : vector<8x128xf32> to vector<1x8x128xf32>
      %cst_324 = arith.constant dense<0.000000e+00> : vector<1xf32>
      %531 = vector.multi_reduction <add>, %530, %cst_324 [1, 2] : vector<1x8x128xf32> to vector<1xf32>
      %532 = vector.shape_cast %531 : vector<1xf32> to vector<1x1x1xf32>
      %533 = vector.extract %532[0, 0, 0] : f32 from vector<1x1x1xf32>
      %c0_325 = arith.constant 0 : index
      %c0_326 = arith.constant 0 : index
      %c0_327 = arith.constant 0 : index
      %534 = vector.load %arg10[%c0_325, %c0_326, %c0_327] : memref<2x8x128xf32, #tpu.memory_space<vmem>>, vector<1x8x128xf32>
      %535 = vector.shape_cast %534 : vector<1x8x128xf32> to vector<8x128xf32>
      %536 = vector.shape_cast %535 : vector<8x128xf32> to vector<1x8x128xf32>
      %cst_328 = arith.constant dense<0.000000e+00> : vector<1xf32>
      %537 = vector.multi_reduction <add>, %536, %cst_328 [1, 2] : vector<1x8x128xf32> to vector<1xf32>
      %538 = vector.shape_cast %537 : vector<1xf32> to vector<1x1x1xf32>
      %539 = vector.extract %538[0, 0, 0] : f32 from vector<1x1x1xf32>
      %cst_329 = arith.constant 1.000000e+00 : f32
      %540 = arith.maximumf %527, %cst_329 : f32
      %541 = arith.divf %521, %540 : f32
      %cst_330 = arith.constant 0.000000e+00 : f32
      %542 = arith.addf %cst_330, %541 : f32
      %cst_331 = arith.constant 0.000000e+00 : f32
      %543 = arith.cmpf ogt, %533, %cst_331 : f32
      %cst_332 = arith.constant 6.000000e+00 : f32
      %544 = arith.mulf %533, %cst_332 : f32
      %cst_333 = arith.constant 1.000000e+00 : f32
      %545 = arith.maximumf %544, %cst_333 : f32
      %546 = arith.divf %539, %545 : f32
      %cst_334 = arith.constant 0.000000e+00 : f32
      %547 = arith.select %543, %546, %cst_334 : f32
      %cst_335 = arith.constant 0.000000e+00 : f32
      %548 = arith.addf %cst_335, %547 : f32
      %c1_336 = arith.constant 1 : index
      %c0_337 = arith.constant 0 : index
      %c0_338 = arith.constant 0 : index
      %549 = vector.load %arg7[%c1_336, %c0_337, %c0_338] : memref<2x8x128xf32, #tpu.memory_space<vmem>>, vector<1x8x128xf32>
      %550 = vector.shape_cast %549 : vector<1x8x128xf32> to vector<8x128xf32>
      %551 = vector.shape_cast %550 : vector<8x128xf32> to vector<1x8x128xf32>
      %cst_339 = arith.constant dense<0.000000e+00> : vector<1xf32>
      %552 = vector.multi_reduction <add>, %551, %cst_339 [1, 2] : vector<1x8x128xf32> to vector<1xf32>
      %553 = vector.shape_cast %552 : vector<1xf32> to vector<1x1x1xf32>
      %554 = vector.extract %553[0, 0, 0] : f32 from vector<1x1x1xf32>
      %c1_340 = arith.constant 1 : index
      %c0_341 = arith.constant 0 : index
      %c0_342 = arith.constant 0 : index
      %555 = vector.load %arg8[%c1_340, %c0_341, %c0_342] : memref<2x8x128xf32, #tpu.memory_space<vmem>>, vector<1x8x128xf32>
      %556 = vector.shape_cast %555 : vector<1x8x128xf32> to vector<8x128xf32>
      %557 = vector.shape_cast %556 : vector<8x128xf32> to vector<1x8x128xf32>
      %cst_343 = arith.constant dense<0.000000e+00> : vector<1xf32>
      %558 = vector.multi_reduction <add>, %557, %cst_343 [1, 2] : vector<1x8x128xf32> to vector<1xf32>
      %559 = vector.shape_cast %558 : vector<1xf32> to vector<1x1x1xf32>
      %560 = vector.extract %559[0, 0, 0] : f32 from vector<1x1x1xf32>
      %c1_344 = arith.constant 1 : index
      %c0_345 = arith.constant 0 : index
      %c0_346 = arith.constant 0 : index
      %561 = vector.load %arg9[%c1_344, %c0_345, %c0_346] : memref<2x8x128xf32, #tpu.memory_space<vmem>>, vector<1x8x128xf32>
      %562 = vector.shape_cast %561 : vector<1x8x128xf32> to vector<8x128xf32>
      %563 = vector.shape_cast %562 : vector<8x128xf32> to vector<1x8x128xf32>
      %cst_347 = arith.constant dense<0.000000e+00> : vector<1xf32>
      %564 = vector.multi_reduction <add>, %563, %cst_347 [1, 2] : vector<1x8x128xf32> to vector<1xf32>
      %565 = vector.shape_cast %564 : vector<1xf32> to vector<1x1x1xf32>
      %566 = vector.extract %565[0, 0, 0] : f32 from vector<1x1x1xf32>
      %c1_348 = arith.constant 1 : index
      %c0_349 = arith.constant 0 : index
      %c0_350 = arith.constant 0 : index
      %567 = vector.load %arg10[%c1_348, %c0_349, %c0_350] : memref<2x8x128xf32, #tpu.memory_space<vmem>>, vector<1x8x128xf32>
      %568 = vector.shape_cast %567 : vector<1x8x128xf32> to vector<8x128xf32>
      %569 = vector.shape_cast %568 : vector<8x128xf32> to vector<1x8x128xf32>
      %cst_351 = arith.constant dense<0.000000e+00> : vector<1xf32>
      %570 = vector.multi_reduction <add>, %569, %cst_351 [1, 2] : vector<1x8x128xf32> to vector<1xf32>
      %571 = vector.shape_cast %570 : vector<1xf32> to vector<1x1x1xf32>
      %572 = vector.extract %571[0, 0, 0] : f32 from vector<1x1x1xf32>
      %cst_352 = arith.constant 1.000000e+00 : f32
      %573 = arith.maximumf %560, %cst_352 : f32
      %574 = arith.divf %554, %573 : f32
      %575 = arith.addf %542, %574 : f32
      %cst_353 = arith.constant 0.000000e+00 : f32
      %576 = arith.cmpf ogt, %566, %cst_353 : f32
      %cst_354 = arith.constant 6.000000e+00 : f32
      %577 = arith.mulf %566, %cst_354 : f32
      %cst_355 = arith.constant 1.000000e+00 : f32
      %578 = arith.maximumf %577, %cst_355 : f32
      %579 = arith.divf %572, %578 : f32
      %cst_356 = arith.constant 0.000000e+00 : f32
      %580 = arith.select %576, %579, %cst_356 : f32
      %581 = arith.addf %548, %580 : f32
      %cst_357 = arith.constant 5.000000e-01 : f32
      %582 = arith.mulf %575, %cst_357 : f32
      %c0_358 = arith.constant 0 : index
      %c0_359 = arith.constant 0 : index
      %583 = memref.load %arg5[%c0_358, %c0_359] : memref<1x1xf32, #tpu.memory_space<smem>>
      memref.store %582, %arg5[%c0_358, %c0_359] : memref<1x1xf32, #tpu.memory_space<smem>>
      %cst_360 = arith.constant 5.000000e-01 : f32
      %584 = arith.mulf %581, %cst_360 : f32
      %c0_361 = arith.constant 0 : index
      %c0_362 = arith.constant 0 : index
      %585 = memref.load %arg6[%c0_361, %c0_362] : memref<1x1xf32, #tpu.memory_space<smem>>
      memref.store %584, %arg6[%c0_361, %c0_362] : memref<1x1xf32, #tpu.memory_space<smem>>
    } else {
    }
    return
  }
  func.func @transform_0(%arg0: i32) -> (i32, i32, i32) {
    %c0_i32 = arith.constant 0 : i32
    %c0_i32_0 = arith.constant 0 : i32
    %c0_i32_1 = arith.constant 0 : i32
    return %c0_i32, %c0_i32_0, %arg0 : i32, i32, i32
  }
  func.func @transform_1(%arg0: i32) -> (i32, i32) {
    %c0_i32 = arith.constant 0 : i32
    %c0_i32_0 = arith.constant 0 : i32
    %c0_i32_1 = arith.constant 0 : i32
    return %c0_i32, %c0_i32_0 : i32, i32
  }
  func.func @transform_2(%arg0: i32) -> (i32, i32, i32) {
    %c0_i32 = arith.constant 0 : i32
    %c0_i32_0 = arith.constant 0 : i32
    %c0_i32_1 = arith.constant 0 : i32
    return %c0_i32, %c0_i32_0, %arg0 : i32, i32, i32
  }
  func.func @transform_3(%arg0: i32) -> (i32, i32, i32, i32) {
    %c0_i32 = arith.constant 0 : i32
    %c0_i32_0 = arith.constant 0 : i32
    %c0_i32_1 = arith.constant 0 : i32
    %c0_i32_2 = arith.constant 0 : i32
    return %c0_i32, %c0_i32_0, %c0_i32_1, %arg0 : i32, i32, i32, i32
  }
  func.func @transform_4(%arg0: i32) -> (i32, i32) {
    %c0_i32 = arith.constant 0 : i32
    %c0_i32_0 = arith.constant 0 : i32
    %c0_i32_1 = arith.constant 0 : i32
    return %c0_i32, %c0_i32_0 : i32, i32
  }
  func.func @transform_5(%arg0: i32) -> (i32, i32) {
    %c0_i32 = arith.constant 0 : i32
    %c0_i32_0 = arith.constant 0 : i32
    %c0_i32_1 = arith.constant 0 : i32
    return %c0_i32, %c0_i32_0 : i32, i32
  }
}

</mosaic_0001>

<llo_original>
// kernel: tpu_custom_call.1
$region0: #{tpu_custom_call.1}
  #allocation0 [shape = 'u32[]', space=smem, size = 0x4, offset = 0x4, fixed_abs, tag = 'smem constant byte address 0x4 - core index']
  #allocation1 [shape = 'u32[144,128]{1,0:T(1,128)}', space=vmem, size = 0x12000, scoped, tag = 'internal scratch']
  #allocation2 [shape = 'f32[2,8,128]{2,1,0:T(8,128)}', space=vmem, size = 0x2000, scoped, tag = 'scratch operand']
  #allocation3 [shape = 'f32[2,8,128]{2,1,0:T(8,128)}', space=vmem, size = 0x2000, scoped, tag = 'scratch operand']
  #allocation4 [shape = 'f32[2,8,128]{2,1,0:T(8,128)}', space=vmem, size = 0x2000, scoped, tag = 'scratch operand']
  #allocation5 [shape = 'f32[2,8,128]{2,1,0:T(8,128)}', space=vmem, size = 0x2000, scoped, tag = 'scratch operand']
  %s0 = inlined_call_operand.hbm [shape: f32[16,8,750], index: 0, kind: input, shape index: {}]
  %s1 = inlined_call_operand.vmem [shape: f32[2,13], index: 1, kind: input, shape index: {}]
  %s2 = inlined_call_operand.hbm [shape: f32[2,8,750], index: 2, kind: input, shape index: {}]
  %s3 = inlined_call_operand.hbm [shape: f32[6,2,8,750], index: 3, kind: input, shape index: {}]
  %s4 = inlined_call_operand.hbm [shape: f32[1,1], index: 4, kind: output, shape index: {0}]
  %s5 = inlined_call_operand.hbm [shape: f32[1,1], index: 5, kind: output, shape index: {1}]
  %6 = xla_tuple %s4, %s5
  %s7 = sld [smem:[#allocation0]]
  $region81: #{tpu_custom_call.1} parent=0
    _
  %s9 = ssub.s32 1, %s7
  %s10 = scalar_select 0, %s9, %s7
  $region1: #{tpu_custom_call.1} parent=0
    #allocation6 [shape = 'u8[262144]{0}', space=vmem, size = 0x40000, scoped, tag = 'input window, operand 0']
    #allocation7 [shape = 's32[2]{0}', space=sflag, size = 0x8, scoped, tag = 'scoped memory for tpu_custom_call.1']
    #allocation8 [shape = 's32[2]{0}', space=sflag, size = 0x8, scoped, tag = 'scoped memory for tpu_custom_call.1']
    #allocation9 [shape = 's32[2]{0}', space=sflag, size = 0x8, scoped, tag = 'scoped memory for tpu_custom_call.1']
    #allocation10 [shape = 'u8[1024]{0}', space=smem, size = 0x400, scoped, tag = 'input window, operand 1, single buffered']
    #allocation11 [shape = 'u8[32768]{0}', space=vmem, size = 0x8000, scoped, tag = 'input window, operand 2']
    #allocation12 [shape = 's32[2]{0}', space=sflag, size = 0x8, scoped, tag = 'scoped memory for tpu_custom_call.1']
    #allocation13 [shape = 'u8[196608]{0}', space=vmem, size = 0x30000, scoped, tag = 'input window, operand 3']
    #allocation14 [shape = 'u8[512]{0}', space=smem, size = 0x200, scoped, tag = 'output window, operand 0, single buffered']
    #allocation15 [shape = 'u8[512]{0}', space=smem, size = 0x200, scoped, tag = 'output window, operand 1, single buffered']
    #allocation16 [shape = 's32[1]{0}', space=sflag, size = 0x4, scoped, tag = 'scoped memory for tpu_custom_call.1']
    %11 = vsyncpa [#allocation7], 0
    %s12 = scalar_lea.sflag [#allocation7], 1
    %13 = vsyncpa %s12, 0
    %14 = vsyncpa [#allocation9], 0
    %15 = vsyncpa [#allocation12], 0
    %s16 = scalar_lea.sflag [#allocation12], 1
    %17 = vsyncpa %s16, 0
    %18 = vsyncpa [#allocation8], 0
    %19 = vsyncpa [#allocation16], 0
    loop: start=0, step=1, limit=5
    $region2: #{tpu_custom_call.1} parent=1 // loop_pre_header
      _
    $region3: #{tpu_custom_call.1} parent=1 // loop_header
      %s21 = sphi 0, %s25
      %p22 = scmp.ge.s32.totalorder %s21, 5
      %s31 = sphi 0, %s33
      %s34 = sphi 0, %s31
      %s35 = sphi 0, %s34
      %s51 = sphi 0, %s35
      %s55 = sphi 0, %s55
      %s57 = sphi 0, %s55
      %s58 = sphi 0, %s57
      %s72 = sphi 0, %s58
      %s78 = sphi 0, %s80
      %s81 = sphi 0, %s78
      %s82 = sphi 0, %s81
      %s98 = sphi 0, %s82
      %s104 = sphi 0, %s106
      %s107 = sphi 0, %s104
      %s108 = sphi 0, %s107
      %s124 = sphi 0, %s108
      %s128 = sphi 0, %s128
      %s130 = sphi 0, %s128
      %s131 = sphi 0, %s130
      %s145 = sphi 0, %s131
      %s149 = sphi 0, %s149
      %s151 = sphi 0, %s149
      %s152 = sphi 0, %s151
      %s166 = sphi 0, %s152
    $region4: #{tpu_custom_call.1} parent=1 // loop_header_branch
      %24 = sbr.rel (%p22) target = $region8
    $region5: #{tpu_custom_call.1} parent=1 // loop_body
      %s26 = ssub.s32 %s21, 1
      %s27 = ssub.s32 %s21, 2
      %s28 = sadd.s32 %s21, 1
      %s29 = ssub.s32 %s21, %s28
      %p30 = scmp.eq.s32.totalorder %s29, 0
      %s32 = sadd.s32 %s31, 1
      %s33 = scalar_select %p30, %s31, %s32
      %p36 = pneg %p30
      %p37 = scmp.eq.s32.totalorder %s21, 2
      %p38 = por %p36, %p37
      %p39 = scmp.ne.s32.totalorder %s31, %s34
      %p40 = scmp.eq.s32.totalorder %s21, 0
      %p41 = por %p39, %p40
      %p42 = scmp.ne.s32.totalorder %s31, %s34
      %p43 = scmp.eq.s32.totalorder %s26, 2
      %p44 = por %p42, %p43
      %p45 = scmp.ne.s32.totalorder %s34, %s35
      %p46 = scmp.eq.s32.totalorder %s26, 0
      %p47 = por %p45, %p46
      %p48 = scmp.ne.s32.totalorder %s34, %s35
      %p49 = scmp.eq.s32.totalorder %s27, 2
      %p50 = por %p48, %p49
      %p52 = scmp.ne.s32.totalorder %s35, %s51
      %p53 = scmp.eq.s32.totalorder %s27, 0
      %p54 = por %p52, %p53
      %s56 = sadd.s32 %s55, 1
      %p59 = scmp.eq.s32.totalorder %s21, 2
      %p60 = scmp.ne.s32.totalorder %s55, %s57
      %p61 = scmp.eq.s32.totalorder %s21, 0
      %p62 = por %p60, %p61
      %p63 = scmp.ne.s32.totalorder %s55, %s57
      %p64 = scmp.eq.s32.totalorder %s26, 2
      %p65 = por %p63, %p64
      %p66 = scmp.ne.s32.totalorder %s57, %s58
      %p67 = scmp.eq.s32.totalorder %s26, 0
      %p68 = por %p66, %p67
      %p69 = scmp.ne.s32.totalorder %s57, %s58
      %p70 = scmp.eq.s32.totalorder %s27, 2
      %p71 = por %p69, %p70
      %p73 = scmp.ne.s32.totalorder %s58, %s72
      %p74 = scmp.eq.s32.totalorder %s27, 0
      %p75 = por %p73, %p74
      %s76 = ssub.s32 %s21, %s28
      %p77 = scmp.eq.s32.totalorder %s76, 0
      %s79 = sadd.s32 %s78, 1
      %s80 = scalar_select %p77, %s78, %s79
      %p83 = pneg %p77
      %p84 = scmp.eq.s32.totalorder %s21, 2
      %p85 = por %p83, %p84
      %p86 = scmp.ne.s32.totalorder %s78, %s81
      %p87 = scmp.eq.s32.totalorder %s21, 0
      %p88 = por %p86, %p87
      %p89 = scmp.ne.s32.totalorder %s78, %s81
      %p90 = scmp.eq.s32.totalorder %s26, 2
      %p91 = por %p89, %p90
      %p92 = scmp.ne.s32.totalorder %s81, %s82
      %p93 = scmp.eq.s32.totalorder %s26, 0
      %p94 = por %p92, %p93
      %p95 = scmp.ne.s32.totalorder %s81, %s82
      %p96 = scmp.eq.s32.totalorder %s27, 2
      %p97 = por %p95, %p96
      %p99 = scmp.ne.s32.totalorder %s82, %s98
      %p100 = scmp.eq.s32.totalorder %s27, 0
      %p101 = por %p99, %p100
      %s102 = ssub.s32 %s21, %s28
      %p103 = scmp.eq.s32.totalorder %s102, 0
      %s105 = sadd.s32 %s104, 1
      %s106 = scalar_select %p103, %s104, %s105
      %p109 = pneg %p103
      %p110 = scmp.eq.s32.totalorder %s21, 2
      %p111 = por %p109, %p110
      %p112 = scmp.ne.s32.totalorder %s104, %s107
      %p113 = scmp.eq.s32.totalorder %s21, 0
      %p114 = por %p112, %p113
      %p115 = scmp.ne.s32.totalorder %s104, %s107
      %p116 = scmp.eq.s32.totalorder %s26, 2
      %p117 = por %p115, %p116
      %p118 = scmp.ne.s32.totalorder %s107, %s108
      %p119 = scmp.eq.s32.totalorder %s26, 0
      %p120 = por %p118, %p119
      %p121 = scmp.ne.s32.totalorder %s107, %s108
      %p122 = scmp.eq.s32.totalorder %s27, 2
      %p123 = por %p121, %p122
      %p125 = scmp.ne.s32.totalorder %s108, %s124
      %p126 = scmp.eq.s32.totalorder %s27, 0
      %p127 = por %p125, %p126
      %s129 = sadd.s32 %s128, 1
      %p132 = scmp.eq.s32.totalorder %s21, 2
      %p133 = scmp.ne.s32.totalorder %s128, %s130
      %p134 = scmp.eq.s32.totalorder %s21, 0
      %p135 = por %p133, %p134
      %p136 = scmp.ne.s32.totalorder %s128, %s130
      %p137 = scmp.eq.s32.totalorder %s26, 2
      %p138 = por %p136, %p137
      %p139 = scmp.ne.s32.totalorder %s130, %s131
      %p140 = scmp.eq.s32.totalorder %s26, 0
      %p141 = por %p139, %p140
      %p142 = scmp.ne.s32.totalorder %s130, %s131
      %p143 = scmp.eq.s32.totalorder %s27, 2
      %p144 = por %p142, %p143
      %p146 = scmp.ne.s32.totalorder %s131, %s145
      %p147 = scmp.eq.s32.totalorder %s27, 0
      %p148 = por %p146, %p147
      %s150 = sadd.s32 %s149, 1
      %p153 = scmp.eq.s32.totalorder %s21, 2
      %p154 = scmp.ne.s32.totalorder %s149, %s151
      %p155 = scmp.eq.s32.totalorder %s21, 0
      %p156 = por %p154, %p155
      %p157 = scmp.ne.s32.totalorder %s149, %s151
      %p158 = scmp.eq.s32.totalorder %s26, 2
      %p159 = por %p157, %p158
      %p160 = scmp.ne.s32.totalorder %s151, %s152
      %p161 = scmp.eq.s32.totalorder %s26, 0
      %p162 = por %p160, %p161
      %p163 = scmp.ne.s32.totalorder %s151, %s152
      %p164 = scmp.eq.s32.totalorder %s27, 2
      %p165 = por %p163, %p164
      %p167 = scmp.ne.s32.totalorder %s152, %s166
      %p168 = scmp.eq.s32.totalorder %s27, 0
      %p169 = por %p167, %p168
      %p170 = scmp.le.s32.totalorder 1, %s21
      %p171 = scmp.lt.s32.totalorder %s21, 4
      %p172 = pnand %p170, %p171
      %p173 = pneg %p172
      // Predicated region
      $region9: #{tpu_custom_call.1} parent=5 // pred_check
        _
      $region10: #{tpu_custom_call.1} parent=5 // pred_check_branch
        %175 = sbr.rel (%p172) target = $region12
      $region11: #{tpu_custom_call.1} parent=5 // pred_region
        %s176 = ssub.s32 %s21, 1
        // Predicated region
        $region13: #{tpu_custom_call.1} parent=11 // pred_check
          %p177 = pneg %p68
        $region14: #{tpu_custom_call.1} parent=11 // pred_check_branch
          %179 = sbr.rel (%p177) target = $region16
        $region15: #{tpu_custom_call.1} parent=11 // pred_region
          %s181 = ssub.s32 32, 32
          %182 = vsyncadd [#allocation9], %s181
          %s184 = sshll.u32 %s1, 4
          %s185 = int_to_ptr.vmem [resolvable:$true] %s184
          %187 = dma.vmem_to_smem %s185, 32, [#allocation10], [#allocation9]
        $region16: #{tpu_custom_call.1} parent=11 // pred_fallthru
          _
      $region12: #{tpu_custom_call.1} parent=5 // pred_fallthru
        _
      %p188 = scmp.lt.s32.totalorder %s21, 3
      // Predicated region
      $region17: #{tpu_custom_call.1} parent=5 // pred_check
        %p189 = pneg %p188
      $region18: #{tpu_custom_call.1} parent=5 // pred_check_branch
        %191 = sbr.rel (%p189) target = $region20
      $region19: #{tpu_custom_call.1} parent=5 // pred_region
        // Predicated region
        $region21: #{tpu_custom_call.1} parent=19 // pred_check
          %p192 = pneg %p41
        $region22: #{tpu_custom_call.1} parent=19 // pred_check_branch
          %194 = sbr.rel (%p192) target = $region24
        $region23: #{tpu_custom_call.1} parent=19 // pred_region
          %s195 = sand.u32 %s31, 1
          %s196 = scalar_lea.sflag [#allocation7], %s195
          %s197 = sand.u32 %s31, 1
          %s198 = smul.addr %s197, 256
          %s199 = scalar_lea.vmem [#allocation6], %s198
          %s200 = smul.u32 2, %s21
          %s202 = ssub.s32 4096, 4096
          %203 = vsyncadd %s196, %s202
          %s204 = smul.addr %s200, 128
          %s205 = scalar_lea.hbm %s0, %s204
          %s206 = sshll.u32 %s199, 4
          %s207 = int_to_ptr.vmem [resolvable:$true] %s206
          %212 = dma.hbm_to_vmem [thread:$0]  %s205, 4096, %s207, %s196, 768, 256, 16
        $region24: #{tpu_custom_call.1} parent=19 // pred_fallthru
          _
        // Predicated region
        $region25: #{tpu_custom_call.1} parent=19 // pred_check
          %p213 = pneg %p88
        $region26: #{tpu_custom_call.1} parent=19 // pred_check_branch
          %215 = sbr.rel (%p213) target = $region28
        $region27: #{tpu_custom_call.1} parent=19 // pred_region
          %s216 = sand.u32 %s21, 1
          %s217 = scalar_lea.sflag [#allocation12], %s216
          %s218 = sand.u32 %s78, 1
          %s219 = smul.addr %s218, 32
          %s220 = scalar_lea.vmem [#allocation11], %s219
          %s221 = smul.u32 2, %s21
          %s223 = ssub.s32 512, 512
          %224 = vsyncadd %s217, %s223
          %s225 = smul.addr %s221, 128
          %s226 = scalar_lea.hbm %s2, %s225
          %s227 = sshll.u32 %s220, 4
          %s228 = int_to_ptr.vmem [resolvable:$true] %s227
          %233 = dma.hbm_to_vmem [thread:$0]  %s226, 512, %s228, %s217, 768, 256, 16
        $region28: #{tpu_custom_call.1} parent=19 // pred_fallthru
          _
        // Predicated region
        $region29: #{tpu_custom_call.1} parent=19 // pred_check
          %p234 = pneg %p114
        $region30: #{tpu_custom_call.1} parent=19 // pred_check_branch
          %236 = sbr.rel (%p234) target = $region32
        $region31: #{tpu_custom_call.1} parent=19 // pred_region
          %s237 = sand.u32 %s21, 1
          %s238 = scalar_lea.sflag [#allocation12], %s237
          %s239 = sand.u32 %s104, 1
          %s240 = smul.addr %s239, 192
          %s241 = scalar_lea.vmem [#allocation13], %s240
          %s242 = smul.u32 2, %s21
          %s244 = ssub.s32 3072, 3072
          %245 = vsyncadd %s238, %s244
          %s246 = smul.addr %s242, 128
          %s247 = scalar_lea.hbm %s3, %s246
          %s248 = sshll.u32 %s241, 4
          %s249 = int_to_ptr.vmem [resolvable:$true] %s248
          %254 = dma.hbm_to_vmem [thread:$0]  %s247, 3072, %s249, %s238, 768, 256, 16
        $region32: #{tpu_custom_call.1} parent=19 // pred_fallthru
          _
      $region20: #{tpu_custom_call.1} parent=5 // pred_fallthru
        _
      %p255 = scmp.le.s32.totalorder 1, %s21
      %p256 = scmp.lt.s32.totalorder %s21, 4
      %p257 = pnand %p255, %p256
      %p258 = pneg %p257
      // Predicated region
      $region33: #{tpu_custom_call.1} parent=5 // pred_check
        _
      $region34: #{tpu_custom_call.1} parent=5 // pred_check_branch
        %260 = sbr.rel (%p257) target = $region36
      $region35: #{tpu_custom_call.1} parent=5 // pred_region
        %s261 = ssub.s32 %s21, 1
        %s262 = sand.u32 %s34, 1
        %s263 = scalar_lea.sflag [#allocation7], %s262
        %s264 = sand.u32 %s34, 1
        %s265 = smul.addr %s264, 256
        %s266 = scalar_lea.vmem [#allocation6], %s265
        // Predicated region
        $region37: #{tpu_custom_call.1} parent=35 // pred_check
          %p267 = pneg %p47
        $region38: #{tpu_custom_call.1} parent=35 // pred_check_branch
          %269 = sbr.rel (%p267) target = $region40
        $region39: #{tpu_custom_call.1} parent=35 // pred_region
          %270 = dma.done %s263, 4096
        $region40: #{tpu_custom_call.1} parent=35 // pred_fallthru
          _
        // Predicated region
        $region41: #{tpu_custom_call.1} parent=35 // pred_check
          %p271 = pneg %p68
        $region42: #{tpu_custom_call.1} parent=35 // pred_check_branch
          %273 = sbr.rel (%p271) target = $region44
        $region43: #{tpu_custom_call.1} parent=35 // pred_region
          %274 = dma.done [#allocation9], 32
        $region44: #{tpu_custom_call.1} parent=35 // pred_fallthru
          _
        %s275 = sand.u32 %s26, 1
        %s276 = scalar_lea.sflag [#allocation12], %s275
        %s277 = sand.u32 %s81, 1
        %s278 = smul.addr %s277, 32
        %s279 = scalar_lea.vmem [#allocation11], %s278
        // Predicated region
        $region45: #{tpu_custom_call.1} parent=35 // pred_check
          %p280 = pneg %p94
        $region46: #{tpu_custom_call.1} parent=35 // pred_check_branch
          %282 = sbr.rel (%p280) target = $region48
        $region47: #{tpu_custom_call.1} parent=35 // pred_region
          %283 = dma.done %s276, 512
        $region48: #{tpu_custom_call.1} parent=35 // pred_fallthru
          _
        %s284 = sand.u32 %s26, 1
        %s285 = scalar_lea.sflag [#allocation12], %s284
        %s286 = sand.u32 %s107, 1
        %s287 = smul.addr %s286, 192
        %s288 = scalar_lea.vmem [#allocation13], %s287
        // Predicated region
        $region49: #{tpu_custom_call.1} parent=35 // pred_check
          %p289 = pneg %p120
        $region50: #{tpu_custom_call.1} parent=35 // pred_check_branch
          %291 = sbr.rel (%p289) target = $region52
        $region51: #{tpu_custom_call.1} parent=35 // pred_region
          %292 = dma.done %s285, 3072
        $region52: #{tpu_custom_call.1} parent=35 // pred_fallthru
          _
        %293 = sfence
        %s294 = sand.u32 %s34, 1
        %s295 = scalar_lea.sflag [#allocation7], %s294
        %s296 = sand.u32 %s34, 1
        %s297 = smul.addr %s296, 256
        %s298 = scalar_lea.vmem [#allocation6], %s297
        %p299 = pneg %p47
        %p300 = pneg %p44
        %p301 = pneg %p68
        %p302 = pneg %p65
        %s303 = sand.u32 %s26, 1
        %s304 = scalar_lea.sflag [#allocation12], %s303
        %s305 = sand.u32 %s81, 1
        %s306 = smul.addr %s305, 32
        %s307 = scalar_lea.vmem [#allocation11], %s306
        %p308 = pneg %p94
        %p309 = pneg %p91
        %s310 = sand.u32 %s26, 1
        %s311 = scalar_lea.sflag [#allocation12], %s310
        %s312 = sand.u32 %s107, 1
        %s313 = smul.addr %s312, 192
        %s314 = scalar_lea.vmem [#allocation13], %s313
        %p315 = pneg %p120
        %p316 = pneg %p117
        %p317 = pneg %p141
        %p318 = pneg %p138
        %p319 = pneg %p162
        %p320 = pneg %p159
        %s321 = smul.u32 2, %s26
        %s322 = smul.u32 2, %s26
        %s323 = smul.u32 2, %s26
        %p324 = scmp.eq.s32.totalorder %s26, 0
        // Predicated region
        $region53: #{tpu_custom_call.1} parent=35 // pred_check
          %p325 = pneg %p324
        $region54: #{tpu_custom_call.1} parent=35 // pred_check_branch
          %327 = sbr.rel (%p325) target = $region56
        $region55: #{tpu_custom_call.1} parent=35 // pred_region
          %328 = vst [vmem:[#allocation2] sm:$0xff] 0.0
          %329 = vst [vmem:[#allocation2 + $0x8] sm:$0xff] 0.0
          %330 = vst [vmem:[#allocation3] sm:$0xff] 0.0
          %331 = vst [vmem:[#allocation3 + $0x8] sm:$0xff] 0.0
          %332 = vst [vmem:[#allocation4] sm:$0xff] 0.0
          %333 = vst [vmem:[#allocation4 + $0x8] sm:$0xff] 0.0
          %334 = vst [vmem:[#allocation5] sm:$0xff] 0.0
          %335 = vst [vmem:[#allocation5 + $0x8] sm:$0xff] 0.0
        $region56: #{tpu_custom_call.1} parent=35 // pred_fallthru
          _
        %s336 = smul.u32 %s26, 256
        %v337 = vlaneseq
        %v338 = vand.u32 %v337, 127
        %v339 = vadd.s32 %v338, 128
        %v340 = vstv %s336
        %v341 = vadd.s32 %v340, %v338
        %v342 = vadd.s32 %v340, %v339
        %vm343 = vcmp.lt.s32.totalorder %v341, 750
        %vm344 = vcmp.lt.s32.totalorder %v342, 750
        %v345 = vld [vmem:[%s279] sm:$0xff]
        %v346 = vld [vmem:[%s279 + $0x8] sm:$0xff]
        %v347 = vmax.f32 %v345, 0.0001
        %v348 = vmax.f32 %v346, 0.0001
        %v349 = vmin.f32 %v347, 0.9999
        %v350 = vmin.f32 %v348, 0.9999
        %s351 = scalar_lea.vmem %s266, 48 [#allocation6]
        %v352 = vld [vmem:[%s351] sm:$0xff]
        %v353 = vld [vmem:[%s351 + $0x8] sm:$0xff]
        %s354 = sld [smem:[#allocation10 + $0x3]]
        %v355 = vstv %s354
        %v356 = vmin.f32 %v352, %v355
        %v357 = vmin.f32 %v353, %v355
        %v358 = vld [vmem:[%s266] sm:$0xff]
        %v359 = vld [vmem:[%s266 + $0x8] sm:$0xff]
        %s360 = sld [smem:[#allocation10]]
        %v361 = vstv %s360
        %v362 = vmax.f32 %v358, %v361
        %v363 = vmax.f32 %v359, %v361
        %v364 = vsub.f32 %v356, %v362
        %v365 = vsub.f32 %v357, %v363
        %v366 = vmax.f32 %v364, 0.0
        %v367 = vmax.f32 %v365, 0.0
        %s368 = scalar_lea.vmem %s266, 64 [#allocation6]
        %v369 = vld [vmem:[%s368] sm:$0xff]
        %v370 = vld [vmem:[%s368 + $0x8] sm:$0xff]
        %s371 = sld [smem:[#allocation10 + $0x4]]
        %v372 = vstv %s371
        %v373 = vmin.f32 %v369, %v372
        %v374 = vmin.f32 %v370, %v372
        %s375 = scalar_lea.vmem %s266, 16 [#allocation6]
        %v376 = vld [vmem:[%s375] sm:$0xff]
        %v377 = vld [vmem:[%s375 + $0x8] sm:$0xff]
        %s378 = sld [smem:[#allocation10 + $0x1]]
        %v379 = vstv %s378
        %v380 = vmax.f32 %v376, %v379
        %v381 = vmax.f32 %v377, %v379
        %v382 = vsub.f32 %v373, %v380
        %v383 = vsub.f32 %v374, %v381
        %v384 = vmax.f32 %v382, 0.0
        %v385 = vmax.f32 %v383, 0.0
        %v386 = vmul.f32 %v366, %v384
        %v387 = vmul.f32 %v367, %v385
        %s388 = scalar_lea.vmem %s266, 80 [#allocation6]
        %v389 = vld [vmem:[%s388] sm:$0xff]
        %v390 = vld [vmem:[%s388 + $0x8] sm:$0xff]
        %s391 = sld [smem:[#allocation10 + $0x5]]
        %v392 = vstv %s391
        %v393 = vmin.f32 %v389, %v392
        %v394 = vmin.f32 %v390, %v392
        %s395 = scalar_lea.vmem %s266, 32 [#allocation6]
        %v396 = vld [vmem:[%s395] sm:$0xff]
        %v397 = vld [vmem:[%s395 + $0x8] sm:$0xff]
        %s398 = sld [smem:[#allocation10 + $0x2]]
        %v399 = vstv %s398
        %v400 = vmax.f32 %v396, %v399
        %v401 = vmax.f32 %v397, %v399
        %v402 = vsub.f32 %v393, %v400
        %v403 = vsub.f32 %v394, %v401
        %v404 = vmax.f32 %v402, 0.0
        %v405 = vmax.f32 %v403, 0.0
        %v406 = vmul.f32 %v386, %v404
        %v407 = vmul.f32 %v387, %v405
        %s408 = scalar_lea.vmem %s266, 96 [#allocation6]
        %v409 = vld [vmem:[%s408] sm:$0xff]
        %v410 = vld [vmem:[%s408 + $0x8] sm:$0xff]
        %s411 = sld [smem:[#allocation10 + $0x6]]
        %v412 = vstv %s411
        %v413 = vadd.f32 %v409, %v412
        %v414 = vadd.f32 %v410, %v412
        %v415 = vsub.f32 %v413, %v406
        %v416 = vsub.f32 %v414, %v407
        %v417 = vmax.f32 %v415, 1e-08
        %v418 = vmax.f32 %v416, 1e-08
        %v419 = vrcp.pop %v417
        %v420 = vmul.f32 %v406, %v419
        %v421 = vrcp.pop %v418
        %v422 = vmul.f32 %v407, %v421
        %vm423 = vcmp.ge.f32.partialorder %v420, 0.5
        %vm424 = vcmp.ge.f32.partialorder %v422, 0.5
        %vm425 = vcmp.lt.f32.partialorder %v420, 0.4
        %vm426 = vcmp.lt.f32.partialorder %v422, 0.4
        %vm427 = vmor %vm423, %vm425
        %vm428 = vmor %vm424, %vm426
        %v429 = vsel %vm343, 1, 0
        %v430 = vsel %vm344, 1, 0
        %vm431 = vcmp.eq.s32.totalorder %v429, 1
        %vm432 = vcmp.eq.s32.totalorder %v430, 1
        %vm433 = vmand %vm423, %vm431
        %vm434 = vmand %vm424, %vm432
        %vm435 = vmand %vm427, %vm431
        %vm436 = vmand %vm428, %vm432
        %v437 = vsub.f32 1.0, %v349
        %v438 = vsub.f32 1.0, %v350
        %v439 = vsel %vm433, %v437, %v349
        %v440 = vsel %vm434, %v438, %v350
        %v441 = vsel %vm433, 0.25, 0.75
        %v442 = vsel %vm434, 0.25, 0.75
        %v443 = vmul.f32 %v441, %v439
        %v444 = vmul.f32 %v442, %v440
        %v445 = vmul.f32 %v443, %v439
        %v446 = vmul.f32 %v444, %v440
        %v447 = vsub.f32 0.0, %v445
        %v448 = vsub.f32 0.0, %v446
        %v449 = vsel %vm433, %v349, %v437
        %v450 = vsel %vm434, %v350, %v438
        %v451 = vlog2.pop %v449
        %v452 = vmul.f32 %v451, 0.6931472
        %v453 = vlog2.pop %v450
        %v454 = vmul.f32 %v453, 0.6931472
        %v455 = vmul.f32 %v447, %v452
        %v456 = vmul.f32 %v448, %v454
        %v457 = vsel %vm435, %v455, 0.0
        %v458 = vsel %vm436, %v456, 0.0
        %s459 = sld [smem:[#allocation10 + $0x7]]
        %s460 = scalar_lea.vmem %s266, 112 [#allocation6]
        %v461 = vld [vmem:[%s460] sm:$0xff]
        %v462 = vld [vmem:[%s460 + $0x8] sm:$0xff]
        %v463 = vstv %s459
        %v464 = vsub.f32 %v463, %v461
        %v465 = vsub.f32 %v463, %v462
        %s466 = scalar_lea.vmem %s266, 160 [#allocation6]
        %v467 = vld [vmem:[%s466] sm:$0xff]
        %v468 = vld [vmem:[%s466 + $0x8] sm:$0xff]
        %v469 = vmul.f32 %v464, %v467
        %v470 = vmul.f32 %v465, %v468
        %v471 = vmul.f32 %v469, 10.0
        %v472 = vmul.f32 %v470, 10.0
        %v473 = vld [vmem:[%s288] sm:$0xff]
        %v474 = vld [vmem:[%s288 + $0x8] sm:$0xff]
        %v475 = vsub.f32 %v471, %v473
        %v476 = vsub.f32 %v472, %v474
        %v477 = vand.u32 2147483647, %v475
        %v478 = vand.u32 2147483647, %v476
        %vm479 = vcmp.le.f32.partialorder %v477, 0.11111111
        %vm480 = vcmp.le.f32.partialorder %v478, 0.11111111
        %v481 = vmul.f32 %v477, 4.5
        %v482 = vmul.f32 %v478, 4.5
        %v483 = vmul.f32 %v481, %v477
        %v484 = vmul.f32 %v482, %v478
        %v485 = vsub.f32 %v477, 0.055555556
        %v486 = vsub.f32 %v478, 0.055555556
        %v487 = vsel %vm479, %v483, %v485
        %v488 = vsel %vm480, %v484, %v486
        %v489 = vadd.f32 %v487, 0.0
        %v490 = vadd.f32 %v488, 0.0
        %s491 = sld [smem:[#allocation10 + $0x8]]
        %s492 = scalar_lea.vmem %s266, 128 [#allocation6]
        %v493 = vld [vmem:[%s492] sm:$0xff]
        %v494 = vld [vmem:[%s492 + $0x8] sm:$0xff]
        %v495 = vstv %s491
        %v496 = vsub.f32 %v495, %v493
        %v497 = vsub.f32 %v495, %v494
        %s498 = scalar_lea.vmem %s266, 176 [#allocation6]
        %v499 = vld [vmem:[%s498] sm:$0xff]
        %v500 = vld [vmem:[%s498 + $0x8] sm:$0xff]
        %v501 = vmul.f32 %v496, %v499
        %v502 = vmul.f32 %v497, %v500
        %v503 = vmul.f32 %v501, 10.0
        %v504 = vmul.f32 %v502, 10.0
        %s505 = scalar_lea.vmem %s288, 32 [#allocation13]
        %v506 = vld [vmem:[%s505] sm:$0xff]
        %v507 = vld [vmem:[%s505 + $0x8] sm:$0xff]
        %v508 = vsub.f32 %v503, %v506
        %v509 = vsub.f32 %v504, %v507
        %v510 = vand.u32 2147483647, %v508
        %v511 = vand.u32 2147483647, %v509
        %vm512 = vcmp.le.f32.partialorder %v510, 0.11111111
        %vm513 = vcmp.le.f32.partialorder %v511, 0.11111111
        %v514 = vmul.f32 %v510, 4.5
        %v515 = vmul.f32 %v511, 4.5
        %v516 = vmul.f32 %v514, %v510
        %v517 = vmul.f32 %v515, %v511
        %v518 = vsub.f32 %v510, 0.055555556
        %v519 = vsub.f32 %v511, 0.055555556
        %v520 = vsel %vm512, %v516, %v518
        %v521 = vsel %vm513, %v517, %v519
        %v522 = vadd.f32 %v489, %v520
        %v523 = vadd.f32 %v490, %v521
        %s524 = sld [smem:[#allocation10 + $0x9]]
        %s525 = scalar_lea.vmem %s266, 144 [#allocation6]
        %v526 = vld [vmem:[%s525] sm:$0xff]
        %v527 = vld [vmem:[%s525 + $0x8] sm:$0xff]
        %v528 = vstv %s524
        %v529 = vsub.f32 %v528, %v526
        %v530 = vsub.f32 %v528, %v527
        %s531 = scalar_lea.vmem %s266, 192 [#allocation6]
        %v532 = vld [vmem:[%s531] sm:$0xff]
        %v533 = vld [vmem:[%s531 + $0x8] sm:$0xff]
        %v534 = vmul.f32 %v529, %v532
        %v535 = vmul.f32 %v530, %v533
        %v536 = vmul.f32 %v534, 10.0
        %v537 = vmul.f32 %v535, 10.0
        %s538 = scalar_lea.vmem %s288, 64 [#allocation13]
        %v539 = vld [vmem:[%s538] sm:$0xff]
        %v540 = vld [vmem:[%s538 + $0x8] sm:$0xff]
        %v541 = vsub.f32 %v536, %v539
        %v542 = vsub.f32 %v537, %v540
        %v543 = vand.u32 2147483647, %v541
        %v544 = vand.u32 2147483647, %v542
        %vm545 = vcmp.le.f32.partialorder %v543, 0.11111111
        %vm546 = vcmp.le.f32.partialorder %v544, 0.11111111
        %v547 = vmul.f32 %v543, 4.5
        %v548 = vmul.f32 %v544, 4.5
        %v549 = vmul.f32 %v547, %v543
        %v550 = vmul.f32 %v548, %v544
        %v551 = vsub.f32 %v543, 0.055555556
        %v552 = vsub.f32 %v544, 0.055555556
        %v553 = vsel %vm545, %v549, %v551
        %v554 = vsel %vm546, %v550, %v552
        %v555 = vadd.f32 %v522, %v553
        %v556 = vadd.f32 %v523, %v554
        %s557 = sld [smem:[#allocation10 + $0xa]]
        %s558 = scalar_lea.vmem %s266, 208 [#allocation6]
        %v559 = vld [vmem:[%s558] sm:$0xff]
        %v560 = vld [vmem:[%s558 + $0x8] sm:$0xff]
        %v561 = vstv %s557
        %v562 = vsub.f32 %v561, %v559
        %v563 = vsub.f32 %v561, %v560
        %v564 = vmul.f32 %v562, 10.0
        %v565 = vmul.f32 %v563, 10.0
        %s566 = scalar_lea.vmem %s288, 96 [#allocation13]
        %v567 = vld [vmem:[%s566] sm:$0xff]
        %v568 = vld [vmem:[%s566 + $0x8] sm:$0xff]
        %v569 = vsub.f32 %v564, %v567
        %v570 = vsub.f32 %v565, %v568
        %v571 = vand.u32 2147483647, %v569
        %v572 = vand.u32 2147483647, %v570
        %vm573 = vcmp.le.f32.partialorder %v571, 0.11111111
        %vm574 = vcmp.le.f32.partialorder %v572, 0.11111111
        %v575 = vmul.f32 %v571, 4.5
        %v576 = vmul.f32 %v572, 4.5
        %v577 = vmul.f32 %v575, %v571
        %v578 = vmul.f32 %v576, %v572
        %v579 = vsub.f32 %v571, 0.055555556
        %v580 = vsub.f32 %v572, 0.055555556
        %v581 = vsel %vm573, %v577, %v579
        %v582 = vsel %vm574, %v578, %v580
        %v583 = vadd.f32 %v555, %v581
        %v584 = vadd.f32 %v556, %v582
        %s585 = sld [smem:[#allocation10 + $0xb]]
        %s586 = scalar_lea.vmem %s266, 224 [#allocation6]
        %v587 = vld [vmem:[%s586] sm:$0xff]
        %v588 = vld [vmem:[%s586 + $0x8] sm:$0xff]
        %v589 = vstv %s585
        %v590 = vsub.f32 %v589, %v587
        %v591 = vsub.f32 %v589, %v588
        %v592 = vmul.f32 %v590, 10.0
        %v593 = vmul.f32 %v591, 10.0
        %s594 = scalar_lea.vmem %s288, 128 [#allocation13]
        %v595 = vld [vmem:[%s594] sm:$0xff]
        %v596 = vld [vmem:[%s594 + $0x8] sm:$0xff]
        %v597 = vsub.f32 %v592, %v595
        %v598 = vsub.f32 %v593, %v596
        %v599 = vand.u32 2147483647, %v597
        %v600 = vand.u32 2147483647, %v598
        %vm601 = vcmp.le.f32.partialorder %v599, 0.11111111
        %vm602 = vcmp.le.f32.partialorder %v600, 0.11111111
        %v603 = vmul.f32 %v599, 4.5
        %v604 = vmul.f32 %v600, 4.5
        %v605 = vmul.f32 %v603, %v599
        %v606 = vmul.f32 %v604, %v600
        %v607 = vsub.f32 %v599, 0.055555556
        %v608 = vsub.f32 %v600, 0.055555556
        %v609 = vsel %vm601, %v605, %v607
        %v610 = vsel %vm602, %v606, %v608
        %v611 = vadd.f32 %v583, %v609
        %v612 = vadd.f32 %v584, %v610
        %s613 = sld [smem:[#allocation10 + $0xc]]
        %s614 = scalar_lea.vmem %s266, 240 [#allocation6]
        %v615 = vld [vmem:[%s614] sm:$0xff]
        %v616 = vld [vmem:[%s614 + $0x8] sm:$0xff]
        %v617 = vstv %s613
        %v618 = vsub.f32 %v617, %v615
        %v619 = vsub.f32 %v617, %v616
        %v620 = vmul.f32 %v618, 10.0
        %v621 = vmul.f32 %v619, 10.0
        %s622 = scalar_lea.vmem %s288, 160 [#allocation13]
        %v623 = vld [vmem:[%s622] sm:$0xff]
        %v624 = vld [vmem:[%s622 + $0x8] sm:$0xff]
        %v625 = vsub.f32 %v620, %v623
        %v626 = vsub.f32 %v621, %v624
        %v627 = vand.u32 2147483647, %v625
        %v628 = vand.u32 2147483647, %v626
        %vm629 = vcmp.le.f32.partialorder %v627, 0.11111111
        %vm630 = vcmp.le.f32.partialorder %v628, 0.11111111
        %v631 = vmul.f32 %v627, 4.5
        %v632 = vmul.f32 %v628, 4.5
        %v633 = vmul.f32 %v631, %v627
        %v634 = vmul.f32 %v632, %v628
        %v635 = vsub.f32 %v627, 0.055555556
        %v636 = vsub.f32 %v628, 0.055555556
        %v637 = vsel %vm629, %v633, %v635
        %v638 = vsel %vm630, %v634, %v636
        %v639 = vadd.f32 %v611, %v637
        %v640 = vadd.f32 %v612, %v638
        %v641 = vsel %vm433, %v639, 0.0
        %v642 = vsel %vm434, %v640, 0.0
        %v643 = vsel %vm435, 1, 0
        %v644 = vsel %vm436, 1, 0
        %v645 = vcvt.s32.f32 %v643
        %v646 = vcvt.s32.f32 %v644
        %v647 = vsel %vm433, 1, 0
        %v648 = vsel %vm434, 1, 0
        %v649 = vcvt.s32.f32 %v647
        %v650 = vcvt.s32.f32 %v648
        %v651 = vld [vmem:[#allocation2] sm:$0xff]
        %v652 = vadd.f32 %v457, %v458
        %v653 = vadd.f32 %v651, %v652
        %654 = vst [vmem:[#allocation2] sm:$0xff] %v653
        %v655 = vld [vmem:[#allocation3] sm:$0xff]
        %v656 = vadd.f32 %v645, %v646
        %v657 = vadd.f32 %v655, %v656
        %658 = vst [vmem:[#allocation3] sm:$0xff] %v657
        %v659 = vld [vmem:[#allocation4] sm:$0xff]
        %v660 = vadd.f32 %v649, %v650
        %v661 = vadd.f32 %v659, %v660
        %662 = vst [vmem:[#allocation4] sm:$0xff] %v661
        %v663 = vld [vmem:[#allocation5] sm:$0xff]
        %v664 = vadd.f32 %v641, %v642
        %v665 = vadd.f32 %v663, %v664
        %666 = vst [vmem:[#allocation5] sm:$0xff] %v665
        %s667 = scalar_lea.vmem %s279, 16 [#allocation11]
        %v668 = vld [vmem:[%s667] sm:$0xff]
        %v669 = vld [vmem:[%s667 + $0x8] sm:$0xff]
        %v670 = vmax.f32 %v668, 0.0001
        %v671 = vmax.f32 %v669, 0.0001
        %v672 = vmin.f32 %v670, 0.9999
        %v673 = vmin.f32 %v671, 0.9999
        %v674 = vld [vmem:[%s351] sm:$0xff]
        %v675 = vld [vmem:[%s351 + $0x8] sm:$0xff]
        %s676 = sld [smem:[#allocation10 + $0x83]]
        %v677 = vstv %s676
        %v678 = vmin.f32 %v674, %v677
        %v679 = vmin.f32 %v675, %v677
        %v680 = vld [vmem:[%s266] sm:$0xff]
        %v681 = vld [vmem:[%s266 + $0x8] sm:$0xff]
        %s682 = sld [smem:[#allocation10 + $0x80]]
        %v683 = vstv %s682
        %v684 = vmax.f32 %v680, %v683
        %v685 = vmax.f32 %v681, %v683
        %v686 = vsub.f32 %v678, %v684
        %v687 = vsub.f32 %v679, %v685
        %v688 = vmax.f32 %v686, 0.0
        %v689 = vmax.f32 %v687, 0.0
        %v690 = vld [vmem:[%s368] sm:$0xff]
        %v691 = vld [vmem:[%s368 + $0x8] sm:$0xff]
        %s692 = sld [smem:[#allocation10 + $0x84]]
        %v693 = vstv %s692
        %v694 = vmin.f32 %v690, %v693
        %v695 = vmin.f32 %v691, %v693
        %v696 = vld [vmem:[%s375] sm:$0xff]
        %v697 = vld [vmem:[%s375 + $0x8] sm:$0xff]
        %s698 = sld [smem:[#allocation10 + $0x81]]
        %v699 = vstv %s698
        %v700 = vmax.f32 %v696, %v699
        %v701 = vmax.f32 %v697, %v699
        %v702 = vsub.f32 %v694, %v700
        %v703 = vsub.f32 %v695, %v701
        %v704 = vmax.f32 %v702, 0.0
        %v705 = vmax.f32 %v703, 0.0
        %v706 = vmul.f32 %v688, %v704
        %v707 = vmul.f32 %v689, %v705
        %v708 = vld [vmem:[%s388] sm:$0xff]
        %v709 = vld [vmem:[%s388 + $0x8] sm:$0xff]
        %s710 = sld [smem:[#allocation10 + $0x85]]
        %v711 = vstv %s710
        %v712 = vmin.f32 %v708, %v711
        %v713 = vmin.f32 %v709, %v711
        %v714 = vld [vmem:[%s395] sm:$0xff]
        %v715 = vld [vmem:[%s395 + $0x8] sm:$0xff]
        %s716 = sld [smem:[#allocation10 + $0x82]]
        %v717 = vstv %s716
        %v718 = vmax.f32 %v714, %v717
        %v719 = vmax.f32 %v715, %v717
        %v720 = vsub.f32 %v712, %v718
        %v721 = vsub.f32 %v713, %v719
        %v722 = vmax.f32 %v720, 0.0
        %v723 = vmax.f32 %v721, 0.0
        %v724 = vmul.f32 %v706, %v722
        %v725 = vmul.f32 %v707, %v723
        %v726 = vld [vmem:[%s408] sm:$0xff]
        %v727 = vld [vmem:[%s408 + $0x8] sm:$0xff]
        %s728 = sld [smem:[#allocation10 + $0x86]]
        %v729 = vstv %s728
        %v730 = vadd.f32 %v726, %v729
        %v731 = vadd.f32 %v727, %v729
        %v732 = vsub.f32 %v730, %v724
        %v733 = vsub.f32 %v731, %v725
        %v734 = vmax.f32 %v732, 1e-08
        %v735 = vmax.f32 %v733, 1e-08
        %v736 = vrcp.pop %v734
        %v737 = vmul.f32 %v724, %v736
        %v738 = vrcp.pop %v735
        %v739 = vmul.f32 %v725, %v738
        %vm740 = vcmp.ge.f32.partialorder %v737, 0.5
        %vm741 = vcmp.ge.f32.partialorder %v739, 0.5
        %vm742 = vcmp.lt.f32.partialorder %v737, 0.4
        %vm743 = vcmp.lt.f32.partialorder %v739, 0.4
        %vm744 = vmor %vm740, %vm742
        %vm745 = vmor %vm741, %vm743
        %vm746 = vmand %vm740, %vm431
        %vm747 = vmand %vm741, %vm432
        %vm748 = vmand %vm744, %vm431
        %vm749 = vmand %vm745, %vm432
        %v750 = vsub.f32 1.0, %v672
        %v751 = vsub.f32 1.0, %v673
        %v752 = vsel %vm746, %v750, %v672
        %v753 = vsel %vm747, %v751, %v673
        %v754 = vsel %vm746, 0.25, 0.75
        %v755 = vsel %vm747, 0.25, 0.75
        %v756 = vmul.f32 %v754, %v752
        %v757 = vmul.f32 %v755, %v753
        %v758 = vmul.f32 %v756, %v752
        %v759 = vmul.f32 %v757, %v753
        %v760 = vsub.f32 0.0, %v758
        %v761 = vsub.f32 0.0, %v759
        %v762 = vsel %vm746, %v672, %v750
        %v763 = vsel %vm747, %v673, %v751
        %v764 = vlog2.pop %v762
        %v765 = vmul.f32 %v764, 0.6931472
        %v766 = vlog2.pop %v763
        %v767 = vmul.f32 %v766, 0.6931472
        %v768 = vmul.f32 %v760, %v765
        %v769 = vmul.f32 %v761, %v767
        %v770 = vsel %vm748, %v768, 0.0
        %v771 = vsel %vm749, %v769, 0.0
        %s772 = sld [smem:[#allocation10 + $0x87]]
        %v773 = vld [vmem:[%s460] sm:$0xff]
        %v774 = vld [vmem:[%s460 + $0x8] sm:$0xff]
        %v775 = vstv %s772
        %v776 = vsub.f32 %v775, %v773
        %v777 = vsub.f32 %v775, %v774
        %v778 = vld [vmem:[%s466] sm:$0xff]
        %v779 = vld [vmem:[%s466 + $0x8] sm:$0xff]
        %v780 = vmul.f32 %v776, %v778
        %v781 = vmul.f32 %v777, %v779
        %v782 = vmul.f32 %v780, 10.0
        %v783 = vmul.f32 %v781, 10.0
        %s784 = scalar_lea.vmem %s288, 16 [#allocation13]
        %v785 = vld [vmem:[%s784] sm:$0xff]
        %v786 = vld [vmem:[%s784 + $0x8] sm:$0xff]
        %v787 = vsub.f32 %v782, %v785
        %v788 = vsub.f32 %v783, %v786
        %v789 = vand.u32 2147483647, %v787
        %v790 = vand.u32 2147483647, %v788
        %vm791 = vcmp.le.f32.partialorder %v789, 0.11111111
        %vm792 = vcmp.le.f32.partialorder %v790, 0.11111111
        %v793 = vmul.f32 %v789, 4.5
        %v794 = vmul.f32 %v790, 4.5
        %v795 = vmul.f32 %v793, %v789
        %v796 = vmul.f32 %v794, %v790
        %v797 = vsub.f32 %v789, 0.055555556
        %v798 = vsub.f32 %v790, 0.055555556
        %v799 = vsel %vm791, %v795, %v797
        %v800 = vsel %vm792, %v796, %v798
        %v801 = vadd.f32 %v799, 0.0
        %v802 = vadd.f32 %v800, 0.0
        %s803 = sld [smem:[#allocation10 + $0x88]]
        %v804 = vld [vmem:[%s492] sm:$0xff]
        %v805 = vld [vmem:[%s492 + $0x8] sm:$0xff]
        %v806 = vstv %s803
        %v807 = vsub.f32 %v806, %v804
        %v808 = vsub.f32 %v806, %v805
        %v809 = vld [vmem:[%s498] sm:$0xff]
        %v810 = vld [vmem:[%s498 + $0x8] sm:$0xff]
        %v811 = vmul.f32 %v807, %v809
        %v812 = vmul.f32 %v808, %v810
        %v813 = vmul.f32 %v811, 10.0
        %v814 = vmul.f32 %v812, 10.0
        %s815 = scalar_lea.vmem %s288, 48 [#allocation13]
        %v816 = vld [vmem:[%s815] sm:$0xff]
        %v817 = vld [vmem:[%s815 + $0x8] sm:$0xff]
        %v818 = vsub.f32 %v813, %v816
        %v819 = vsub.f32 %v814, %v817
        %v820 = vand.u32 2147483647, %v818
        %v821 = vand.u32 2147483647, %v819
        %vm822 = vcmp.le.f32.partialorder %v820, 0.11111111
        %vm823 = vcmp.le.f32.partialorder %v821, 0.11111111
        %v824 = vmul.f32 %v820, 4.5
        %v825 = vmul.f32 %v821, 4.5
        %v826 = vmul.f32 %v824, %v820
        %v827 = vmul.f32 %v825, %v821
        %v828 = vsub.f32 %v820, 0.055555556
        %v829 = vsub.f32 %v821, 0.055555556
        %v830 = vsel %vm822, %v826, %v828
        %v831 = vsel %vm823, %v827, %v829
        %v832 = vadd.f32 %v801, %v830
        %v833 = vadd.f32 %v802, %v831
        %s834 = sld [smem:[#allocation10 + $0x89]]
        %v835 = vld [vmem:[%s525] sm:$0xff]
        %v836 = vld [vmem:[%s525 + $0x8] sm:$0xff]
        %v837 = vstv %s834
        %v838 = vsub.f32 %v837, %v835
        %v839 = vsub.f32 %v837, %v836
        %v840 = vld [vmem:[%s531] sm:$0xff]
        %v841 = vld [vmem:[%s531 + $0x8] sm:$0xff]
        %v842 = vmul.f32 %v838, %v840
        %v843 = vmul.f32 %v839, %v841
        %v844 = vmul.f32 %v842, 10.0
        %v845 = vmul.f32 %v843, 10.0
        %s846 = scalar_lea.vmem %s288, 80 [#allocation13]
        %v847 = vld [vmem:[%s846] sm:$0xff]
        %v848 = vld [vmem:[%s846 + $0x8] sm:$0xff]
        %v849 = vsub.f32 %v844, %v847
        %v850 = vsub.f32 %v845, %v848
        %v851 = vand.u32 2147483647, %v849
        %v852 = vand.u32 2147483647, %v850
        %vm853 = vcmp.le.f32.partialorder %v851, 0.11111111
        %vm854 = vcmp.le.f32.partialorder %v852, 0.11111111
        %v855 = vmul.f32 %v851, 4.5
        %v856 = vmul.f32 %v852, 4.5
        %v857 = vmul.f32 %v855, %v851
        %v858 = vmul.f32 %v856, %v852
        %v859 = vsub.f32 %v851, 0.055555556
        %v860 = vsub.f32 %v852, 0.055555556
        %v861 = vsel %vm853, %v857, %v859
        %v862 = vsel %vm854, %v858, %v860
        %v863 = vadd.f32 %v832, %v861
        %v864 = vadd.f32 %v833, %v862
        %s865 = sld [smem:[#allocation10 + $0x8a]]
        %v866 = vld [vmem:[%s558] sm:$0xff]
        %v867 = vld [vmem:[%s558 + $0x8] sm:$0xff]
        %v868 = vstv %s865
        %v869 = vsub.f32 %v868, %v866
        %v870 = vsub.f32 %v868, %v867
        %v871 = vmul.f32 %v869, 10.0
        %v872 = vmul.f32 %v870, 10.0
        %s873 = scalar_lea.vmem %s288, 112 [#allocation13]
        %v874 = vld [vmem:[%s873] sm:$0xff]
        %v875 = vld [vmem:[%s873 + $0x8] sm:$0xff]
        %v876 = vsub.f32 %v871, %v874
        %v877 = vsub.f32 %v872, %v875
        %v878 = vand.u32 2147483647, %v876
        %v879 = vand.u32 2147483647, %v877
        %vm880 = vcmp.le.f32.partialorder %v878, 0.11111111
        %vm881 = vcmp.le.f32.partialorder %v879, 0.11111111
        %v882 = vmul.f32 %v878, 4.5
        %v883 = vmul.f32 %v879, 4.5
        %v884 = vmul.f32 %v882, %v878
        %v885 = vmul.f32 %v883, %v879
        %v886 = vsub.f32 %v878, 0.055555556
        %v887 = vsub.f32 %v879, 0.055555556
        %v888 = vsel %vm880, %v884, %v886
        %v889 = vsel %vm881, %v885, %v887
        %v890 = vadd.f32 %v863, %v888
        %v891 = vadd.f32 %v864, %v889
        %s892 = sld [smem:[#allocation10 + $0x8b]]
        %v893 = vld [vmem:[%s586] sm:$0xff]
        %v894 = vld [vmem:[%s586 + $0x8] sm:$0xff]
        %v895 = vstv %s892
        %v896 = vsub.f32 %v895, %v893
        %v897 = vsub.f32 %v895, %v894
        %v898 = vmul.f32 %v896, 10.0
        %v899 = vmul.f32 %v897, 10.0
        %s900 = scalar_lea.vmem %s288, 144 [#allocation13]
        %v901 = vld [vmem:[%s900] sm:$0xff]
        %v902 = vld [vmem:[%s900 + $0x8] sm:$0xff]
        %v903 = vsub.f32 %v898, %v901
        %v904 = vsub.f32 %v899, %v902
        %v905 = vand.u32 2147483647, %v903
        %v906 = vand.u32 2147483647, %v904
        %vm907 = vcmp.le.f32.partialorder %v905, 0.11111111
        %vm908 = vcmp.le.f32.partialorder %v906, 0.11111111
        %v909 = vmul.f32 %v905, 4.5
        %v910 = vmul.f32 %v906, 4.5
        %v911 = vmul.f32 %v909, %v905
        %v912 = vmul.f32 %v910, %v906
        %v913 = vsub.f32 %v905, 0.055555556
        %v914 = vsub.f32 %v906, 0.055555556
        %v915 = vsel %vm907, %v911, %v913
        %v916 = vsel %vm908, %v912, %v914
        %v917 = vadd.f32 %v890, %v915
        %v918 = vadd.f32 %v891, %v916
        %s919 = sld [smem:[#allocation10 + $0x8c]]
        %v920 = vld [vmem:[%s614] sm:$0xff]
        %v921 = vld [vmem:[%s614 + $0x8] sm:$0xff]
        %v922 = vstv %s919
        %v923 = vsub.f32 %v922, %v920
        %v924 = vsub.f32 %v922, %v921
        %v925 = vmul.f32 %v923, 10.0
        %v926 = vmul.f32 %v924, 10.0
        %s927 = scalar_lea.vmem %s288, 176 [#allocation13]
        %v928 = vld [vmem:[%s927] sm:$0xff]
        %v929 = vld [vmem:[%s927 + $0x8] sm:$0xff]
        %v930 = vsub.f32 %v925, %v928
        %v931 = vsub.f32 %v926, %v929
        %v932 = vand.u32 2147483647, %v930
        %v933 = vand.u32 2147483647, %v931
        %vm934 = vcmp.le.f32.partialorder %v932, 0.11111111
        %vm935 = vcmp.le.f32.partialorder %v933, 0.11111111
        %v936 = vmul.f32 %v932, 4.5
        %v937 = vmul.f32 %v933, 4.5
        %v938 = vmul.f32 %v936, %v932
        %v939 = vmul.f32 %v937, %v933
        %v940 = vsub.f32 %v932, 0.055555556
        %v941 = vsub.f32 %v933, 0.055555556
        %v942 = vsel %vm934, %v938, %v940
        %v943 = vsel %vm935, %v939, %v941
        %v944 = vadd.f32 %v917, %v942
        %v945 = vadd.f32 %v918, %v943
        %v946 = vsel %vm746, %v944, 0.0
        %v947 = vsel %vm747, %v945, 0.0
        %v948 = vsel %vm748, 1, 0
        %v949 = vsel %vm749, 1, 0
        %v950 = vcvt.s32.f32 %v948
        %v951 = vcvt.s32.f32 %v949
        %v952 = vsel %vm746, 1, 0
        %v953 = vsel %vm747, 1, 0
        %v954 = vcvt.s32.f32 %v952
        %v955 = vcvt.s32.f32 %v953
        %s956 = scalar_lea.vmem [#allocation2], 8
        %v957 = vld [vmem:[%s956] sm:$0xff]
        %v958 = vadd.f32 %v770, %v771
        %v959 = vadd.f32 %v957, %v958
        %960 = vst [vmem:[%s956] sm:$0xff] %v959
        %s961 = scalar_lea.vmem [#allocation3], 8
        %v962 = vld [vmem:[%s961] sm:$0xff]
        %v963 = vadd.f32 %v950, %v951
        %v964 = vadd.f32 %v962, %v963
        %965 = vst [vmem:[%s961] sm:$0xff] %v964
        %s966 = scalar_lea.vmem [#allocation4], 8
        %v967 = vld [vmem:[%s966] sm:$0xff]
        %v968 = vadd.f32 %v954, %v955
        %v969 = vadd.f32 %v967, %v968
        %970 = vst [vmem:[%s966] sm:$0xff] %v969
        %s971 = scalar_lea.vmem [#allocation5], 8
        %v972 = vld [vmem:[%s971] sm:$0xff]
        %v973 = vadd.f32 %v946, %v947
        %v974 = vadd.f32 %v972, %v973
        %975 = vst [vmem:[%s971] sm:$0xff] %v974
        %p976 = scmp.eq.s32.totalorder %s26, 2
        // Predicated region
        $region57: #{tpu_custom_call.1} parent=35 // pred_check
          %p977 = pneg %p976
        $region58: #{tpu_custom_call.1} parent=35 // pred_check_branch
          %979 = sbr.rel (%p977) target = $region60
        $region59: #{tpu_custom_call.1} parent=35 // pred_region
          %v980 = vld [vmem:[#allocation2] sm:$0xff]
          %981 = vadd.xlane.f32.xlu0 %v980
          %v982 = vpop.xlane.xlu0 %981
          %v983 = vrot.slane %v982, 4
          %v984 = vadd.f32 %v982, %v983
          %v985 = vrot.slane %v984, 2
          %v986 = vadd.f32 %v984, %v985
          %v987 = vrot.slane %v986, 1
          %v988 = vadd.f32 %v986, %v987
          %s989 = vtos %v988
          %v990 = vld [vmem:[#allocation3] sm:$0xff]
          %991 = vadd.xlane.f32.xlu0 %v990
          %v992 = vpop.xlane.xlu0 %991
          %v993 = vrot.slane %v992, 4
          %v994 = vadd.f32 %v992, %v993
          %v995 = vrot.slane %v994, 2
          %v996 = vadd.f32 %v994, %v995
          %v997 = vrot.slane %v996, 1
          %v998 = vadd.f32 %v996, %v997
          %s999 = vtos %v998
          %v1000 = vld [vmem:[#allocation4] sm:$0xff]
          %1001 = vadd.xlane.f32.xlu0 %v1000
          %v1002 = vpop.xlane.xlu0 %1001
          %v1003 = vrot.slane %v1002, 4
          %v1004 = vadd.f32 %v1002, %v1003
          %v1005 = vrot.slane %v1004, 2
          %v1006 = vadd.f32 %v1004, %v1005
          %v1007 = vrot.slane %v1006, 1
          %v1008 = vadd.f32 %v1006, %v1007
          %s1009 = vtos %v1008
          %v1010 = vld [vmem:[#allocation5] sm:$0xff]
          %1011 = vadd.xlane.f32.xlu0 %v1010
          %v1012 = vpop.xlane.xlu0 %1011
          %v1013 = vrot.slane %v1012, 4
          %v1014 = vadd.f32 %v1012, %v1013
          %v1015 = vrot.slane %v1014, 2
          %v1016 = vadd.f32 %v1014, %v1015
          %v1017 = vrot.slane %v1016, 1
          %v1018 = vadd.f32 %v1016, %v1017
          %s1019 = vtos %v1018
          %s1020 = smax.f32 %s999, 1.0
          %v1021 = vstv %s1020
          %v1022 = vrcp.pop %v1021
          %s1023 = vtos %v1022
          %s1024 = smul.f32 %s989, %s1023
          %s1025 = sadd.f32 %s1024, 0.0
          %p1026 = scmp.gt.f32.partialorder %s1009, 0.0
          %s1027 = smul.f32 %s1009, 6.0
          %s1028 = smax.f32 %s1027, 1.0
          %v1029 = vstv %s1028
          %v1030 = vrcp.pop %v1029
          %s1031 = vtos %v1030
          %s1032 = smul.f32 %s1019, %s1031
          %s1033 = scalar_select %p1026, %s1032, 0.0
          %s1034 = sadd.f32 %s1033, 0.0
          %v1035 = vld [vmem:[%s956] sm:$0xff]
          %1036 = vadd.xlane.f32.xlu0 %v1035
          %v1037 = vpop.xlane.xlu0 %1036
          %v1038 = vrot.slane %v1037, 4
          %v1039 = vadd.f32 %v1037, %v1038
          %v1040 = vrot.slane %v1039, 2
          %v1041 = vadd.f32 %v1039, %v1040
          %v1042 = vrot.slane %v1041, 1
          %v1043 = vadd.f32 %v1041, %v1042
          %s1044 = vtos %v1043
          %v1045 = vld [vmem:[%s961] sm:$0xff]
          %1046 = vadd.xlane.f32.xlu0 %v1045
          %v1047 = vpop.xlane.xlu0 %1046
          %v1048 = vrot.slane %v1047, 4
          %v1049 = vadd.f32 %v1047, %v1048
          %v1050 = vrot.slane %v1049, 2
          %v1051 = vadd.f32 %v1049, %v1050
          %v1052 = vrot.slane %v1051, 1
          %v1053 = vadd.f32 %v1051, %v1052
          %s1054 = vtos %v1053
          %v1055 = vld [vmem:[%s966] sm:$0xff]
          %1056 = vadd.xlane.f32.xlu0 %v1055
          %v1057 = vpop.xlane.xlu0 %1056
          %v1058 = vrot.slane %v1057, 4
          %v1059 = vadd.f32 %v1057, %v1058
          %v1060 = vrot.slane %v1059, 2
          %v1061 = vadd.f32 %v1059, %v1060
          %v1062 = vrot.slane %v1061, 1
          %v1063 = vadd.f32 %v1061, %v1062
          %s1064 = vtos %v1063
          %v1065 = vld [vmem:[%s971] sm:$0xff]
          %1066 = vadd.xlane.f32.xlu0 %v1065
          %v1067 = vpop.xlane.xlu0 %1066
          %v1068 = vrot.slane %v1067, 4
          %v1069 = vadd.f32 %v1067, %v1068
          %v1070 = vrot.slane %v1069, 2
          %v1071 = vadd.f32 %v1069, %v1070
          %v1072 = vrot.slane %v1071, 1
          %v1073 = vadd.f32 %v1071, %v1072
          %s1074 = vtos %v1073
          %s1075 = smax.f32 %s1054, 1.0
          %v1076 = vstv %s1075
          %v1077 = vrcp.pop %v1076
          %s1078 = vtos %v1077
          %s1079 = smul.f32 %s1044, %s1078
          %s1080 = sadd.f32 %s1025, %s1079
          %p1081 = scmp.gt.f32.partialorder %s1064, 0.0
          %s1082 = smul.f32 %s1064, 6.0
          %s1083 = smax.f32 %s1082, 1.0
          %v1084 = vstv %s1083
          %v1085 = vrcp.pop %v1084
          %s1086 = vtos %v1085
          %s1087 = smul.f32 %s1074, %s1086
          %s1088 = scalar_select %p1081, %s1087, 0.0
          %s1089 = sadd.f32 %s1034, %s1088
          %s1090 = smul.f32 %s1080, 0.5
          %s1091 = scalar_lea.smem [#allocation14], 0
          %1092 = sst [smem:[%s1091]] %s1090
          %s1093 = smul.f32 %s1089, 0.5
          %s1094 = scalar_lea.smem [#allocation15], 0
          %1095 = sst [smem:[%s1094]] %s1093
        $region60: #{tpu_custom_call.1} parent=35 // pred_fallthru
          _
        // Predicated region
        $region61: #{tpu_custom_call.1} parent=35 // pred_check
          %p1096 = pneg %p138
        $region62: #{tpu_custom_call.1} parent=35 // pred_check_branch
          %1098 = sbr.rel (%p1096) target = $region64
        $region63: #{tpu_custom_call.1} parent=35 // pred_region
          %s1100 = ssub.s32 16, 16
          %1101 = vsyncadd [#allocation8], %s1100
          %1104 = dma.smem_to_hbm [#allocation14], 16, %s4, [#allocation8]
        $region64: #{tpu_custom_call.1} parent=35 // pred_fallthru
          _
        // Predicated region
        $region65: #{tpu_custom_call.1} parent=35 // pred_check
          %p1105 = pneg %p159
        $region66: #{tpu_custom_call.1} parent=35 // pred_check_branch
          %1107 = sbr.rel (%p1105) target = $region68
        $region67: #{tpu_custom_call.1} parent=35 // pred_region
          %s1109 = ssub.s32 16, 16
          %1110 = vsyncadd [#allocation16], %s1109
          %1113 = dma.smem_to_hbm [#allocation15], 16, %s5, [#allocation16]
        $region68: #{tpu_custom_call.1} parent=35 // pred_fallthru
          _
        // Predicated region
        $region69: #{tpu_custom_call.1} parent=35 // pred_check
          %p1114 = pneg %p138
        $region70: #{tpu_custom_call.1} parent=35 // pred_check_branch
          %1116 = sbr.rel (%p1114) target = $region72
        $region71: #{tpu_custom_call.1} parent=35 // pred_region
          %1117 = dma.done [#allocation8], 16
        $region72: #{tpu_custom_call.1} parent=35 // pred_fallthru
          _
        // Predicated region
        $region73: #{tpu_custom_call.1} parent=35 // pred_check
          %p1118 = pneg %p159
        $region74: #{tpu_custom_call.1} parent=35 // pred_check_branch
          %1120 = sbr.rel (%p1118) target = $region76
        $region75: #{tpu_custom_call.1} parent=35 // pred_region
          %1121 = dma.done [#allocation16], 16
        $region76: #{tpu_custom_call.1} parent=35 // pred_fallthru
          _
        %1122 = sfence
      $region36: #{tpu_custom_call.1} parent=5 // pred_fallthru
        _
      %p1123 = scmp.le.s32.totalorder 2, %s21
      // Predicated region
      $region77: #{tpu_custom_call.1} parent=5 // pred_check
        %p1124 = pneg %p1123
      $region78: #{tpu_custom_call.1} parent=5 // pred_check_branch
        %1126 = sbr.rel (%p1124) target = $region80
      $region79: #{tpu_custom_call.1} parent=5 // pred_region
        %s1127 = ssub.s32 %s21, 2
      $region80: #{tpu_custom_call.1} parent=5 // pred_fallthru
        _
    $region6: #{tpu_custom_call.1} parent=1 // loop_footer
      %s25 = sadd.s32 1, %s21
    $region7: #{tpu_custom_call.1} parent=1 // loop_footer_branch
      %20 = sbr.rel target = $region3
    $region8: #{tpu_custom_call.1} parent=1 // loop_exit
      _
    %1128 = vsyncpa [#allocation7], 1
    %s1129 = scalar_lea.sflag [#allocation7], 1
    %1130 = vsyncpa %s1129, 1
    %1131 = vsyncpa [#allocation12], 1
    %s1132 = scalar_lea.sflag [#allocation12], 1
    %1133 = vsyncpa %s1132, 1
    %1134 = vsyncpa [#allocation8], 1
    %s1135 = scalar_lea.sflag [#allocation8], 1
    %1136 = vsyncpa %s1135, 1
    %1137 = vsyncpa [#allocation16], 1
    %1138 = vsyncpa [#allocation9], 1
    %s1139 = scalar_lea.sflag [#allocation9], 1
    %1140 = vsyncpa %s1139, 1

</llo_original>
